<compile_context>
chip_gen: v7x
topology: tpu7x:2x2x1
jax: 0.10.0
libtpu: 0.0.40
codegen_flags: <defaults>
</compile_context>

<pallas_src>
import numpy as np
import jax
import jax.numpy as jnp
from jax.experimental import pallas as pl
from jax.experimental.pallas import tpu as pltpu


# ----------------------------- Pallas kernel --------------------------------

def _sep_warp_kernel(swap_ref, x_ref, l_ref, r_ref, o_ref):
    # swap_ref: SMEM (B,) int32. Consumed by the index_map (selects x vs x^T
    #           per batch element); unused in the body.
    # x_ref:    (C, N, N) source image, already in the right orientation.
    # l_ref:    (N, N) left (row-sampling) bilinear matrix for this batch.
    # r_ref:    (N, N) right (column-sampling) bilinear matrix for this batch.
    # o_ref:    (C, N, N) warped output:  out[c] = L @ x[c] @ R.
    del swap_ref
    src = x_ref[...].astype(jnp.float32)                        # (C, N, N)
    c = src.shape[0]
    rb = jnp.broadcast_to(r_ref[...][None, :, :], (c,) + r_ref.shape)
    lb = jnp.broadcast_to(l_ref[...][None, :, :], (c,) + l_ref.shape)
    # t[c, h, x] = sum_i src[c, h, i] * R[i, x]      (canonical batched matmul)
    t = jax.lax.dot_general(
        src, rb,
        dimension_numbers=(((2,), (1,)), ((0,), (0,))),
        preferred_element_type=jnp.float32)
    # out[c, y, x] = sum_h L[y, h] * t[c, h, x]
    out = jax.lax.dot_general(
        lb, t,
        dimension_numbers=(((2,), (1,)), ((0,), (0,))),
        preferred_element_type=jnp.float32)
    o_ref[...] = out.astype(o_ref.dtype)


def _separable_warp_matrices(transform, H, W):
    """Per-batch bilinear row/col sampling matrices + orientation flag.

    Non-swap (0/180 deg):   out[c] = L @ x[c]   @ R
    Swap     (90/270 deg):  out[c] = L @ x[c]^T @ R
    Out-of-bounds taps get zero weight (zeros padding), matching warp_affine.
    """
    t = transform.astype(jnp.float32)
    B = t.shape[0]
    bottom = jnp.broadcast_to(jnp.array([[[0.0, 0.0, 1.0]]], jnp.float32),
                              (B, 1, 3))
    inv = jnp.linalg.inv(jnp.concatenate([t, bottom], axis=1))   # dst -> src

    i00, i01, i02 = inv[:, 0, 0], inv[:, 0, 1], inv[:, 0, 2]
    i10, i11, i12 = inv[:, 1, 0], inv[:, 1, 1], inv[:, 1, 2]
    swap = (jnp.abs(i01) + jnp.abs(i10)) > (jnp.abs(i00) + jnp.abs(i11))

    ys = jnp.arange(H, dtype=jnp.float32)     # output rows
    xs = jnp.arange(W, dtype=jnp.float32)     # output cols
    rows = jnp.arange(H, dtype=jnp.float32)   # source rows j
    cols = jnp.arange(W, dtype=jnp.float32)   # source cols i

    def out_by_src(coord, grid):   # (B, n_out), (n_src,) -> (B, n_out, n_src)
        return jnp.maximum(0.0, 1.0 - jnp.abs(coord[:, :, None] - grid[None, None, :]))

    def src_by_out(coord, grid):   # (B, n_out), (n_src,) -> (B, n_src, n_out)
        return jnp.maximum(0.0, 1.0 - jnp.abs(coord[:, None, :] - grid[None, :, None]))

    # no swap: src_x = i00*x + i02 , src_y = i11*y + i12   (cross terms ~ 0)
    L_ns = out_by_src(i11[:, None] * ys + i12[:, None], rows)   # (B, H, H)
    R_ns = src_by_out(i00[:, None] * xs + i02[:, None], cols)   # (B, W, W)
    # swap:    src_x = i01*y + i02 , src_y = i10*x + i12
    L_sw = out_by_src(i01[:, None] * ys + i02[:, None], cols)   # (B, H, W)
    R_sw = src_by_out(i10[:, None] * xs + i12[:, None], rows)   # (B, H, W)

    L = jnp.where(swap[:, None, None], L_sw, L_ns)
    R = jnp.where(swap[:, None, None], R_sw, R_ns)
    return swap.astype(jnp.int32), L, R


def warp_affine_pallas(x, transform):
    """kornia.warp_affine(x, transform, (H, W)) with bilinear + zeros padding.

    Exact for axis-aligned affines (90-degree-multiple rotations, flips,
    axis scalings/translations), which is everything Rotate90 produces.
    # TODO(synk): a general (non-axis-aligned) affine needs a 4-tap gather
    # warp; not required for this module.
    """
    B, C, H, W = x.shape
    assert H == W, "Rotate90 warp kernel assumes square images"  # TODO(synk): non-square support
    N = H
    swap, L, R = _separable_warp_matrices(transform, H, W)
    # Both orientations of the source; the scalar-prefetched swap flag picks
    # which one gets DMA'd per batch element (no in-kernel transpose/branch).
    xx = jnp.stack([x, jnp.swapaxes(x, -1, -2)], axis=1)         # (B, 2, C, N, N)

    flops = 4 * B * C * N * N * N                  # two (N,N)@(N,N) matmuls per channel
    bytes_accessed = 4 * B * (2 * C * N * N + 2 * N * N)

    out = pl.pallas_call(
        _sep_warp_kernel,
        out_shape=jax.ShapeDtypeStruct((B, C, N, N), x.dtype),
        grid_spec=pltpu.PrefetchScalarGridSpec(
            num_scalar_prefetch=1,
            grid=(B,),
            in_specs=[
                pl.BlockSpec((None, None, C, N, N),
                             lambda b, swp: (b, swp[b], 0, 0, 0)),
                pl.BlockSpec((None, N, N), lambda b, swp: (b, 0, 0)),
                pl.BlockSpec((None, N, N), lambda b, swp: (b, 0, 0)),
            ],
            out_specs=pl.BlockSpec((None, C, N, N),
                                   lambda b, swp: (b, 0, 0, 0)),
        ),
        compiler_params=pltpu.CompilerParams(
            dimension_semantics=("parallel",)),
        cost_estimate=pl.CostEstimate(
            flops=flops, transcendentals=0, bytes_accessed=bytes_accessed),
    )(swap, xx, L, R)
    return out


# ------------------------- transform construction (glue) --------------------

def _get_rotation_matrix2d(center, angles_deg, scale):
    """kornia.get_rotation_matrix2d / cv2.getRotationMatrix2D convention."""
    theta = jnp.deg2rad(angles_deg)
    alpha = scale * jnp.cos(theta)
    beta = scale * jnp.sin(theta)
    cx, cy = center[:, 0], center[:, 1]
    row0 = jnp.stack([alpha, beta, (1.0 - alpha) * cx - beta * cy], axis=-1)
    row1 = jnp.stack([-beta, alpha, beta * cx + (1.0 - alpha) * cy], axis=-1)
    return jnp.stack([row0, row1], axis=-2)  # (B, 2, 3), maps src -> dst


# ----------------------------- module equivalents ---------------------------

class Rotate90:
    # TODO(synk): kornia AugmentationBase2D's per-sample apply probability
    # bookkeeping is not reproduced; the transform is applied to every sample.
    def generate_parameters(self, key, input_shape):
        B = input_shape[0]
        k = jax.random.randint(key, (B,), 1, 4)           # torch.randint(1, 4, (B,))
        angles_rad = k.astype(jnp.float32) * (jnp.pi / 2.0)
        return dict(angles=jnp.rad2deg(angles_rad))

    def compute_transformation(self, x, params):
        B, C, H, W = x.shape
        angles = params["angles"].astype(x.dtype)
        center = jnp.tile(jnp.array([[W / 2.0, H / 2.0]], dtype=x.dtype), (B, 1))
        scale = jnp.ones((B,), x.dtype)
        return _get_rotation_matrix2d(center, angles, scale)

    def apply_transform(self, x, params):
        return warp_affine_pallas(x, self.compute_transformation(x, params))

    def __call__(self, x, params):
        return self.apply_transform(x, params)


class Rotate:
    def __init__(self):
        self.transform = Rotate90()

    def __call__(self, key, input_tensor, other_tensor=None):
        params = self.transform.generate_parameters(key, input_tensor.shape)
        if other_tensor is None:
            return self.transform(input_tensor, params)

        others = other_tensor if isinstance(other_tensor, list) else [other_tensor]
        tensors = [input_tensor] + list(others)
        same_geo = all(
            (a.shape[0], a.shape[2], a.shape[3]) == (input_tensor.shape[0],
                                                     input_tensor.shape[2],
                                                     input_tensor.shape[3])
            and a.dtype == input_tensor.dtype
            for a in tensors)
        if same_geo:
            # Fuse all warps (same per-batch transform) into one pallas_call
            # by concatenating along the channel axis.
            t = self.transform.compute_transformation(input_tensor, params)
            chans = [a.shape[1] for a in tensors]
            warped = warp_affine_pallas(jnp.concatenate(tensors, axis=1), t)
            split_pts = [int(v) for v in np.cumsum(chans)[:-1]]
            parts = jnp.split(warped, split_pts, axis=1)
        else:
            parts = [self.transform(a, params) for a in tensors]

        out, rest = parts[0], parts[1:]
        if isinstance(other_tensor, list):
            return out, list(rest)
        return out, rest[0]


# ------------------------------ pure reference -------------------------------

def _warp_affine_ref(x, transform):
    """Independent scalar bilinear warp reference (zeros padding)."""
    x = np.asarray(x, dtype=np.float64)
    t = np.asarray(transform, dtype=np.float64)
    B, C, H, W = x.shape
    out = np.zeros_like(x)
    for b in range(B):
        inv = np.linalg.inv(np.vstack([t[b], [0.0, 0.0, 1.0]]))
        for y in range(H):
            for xp in range(W):
                u, v, _ = inv @ np.array([xp, y, 1.0])
                u0, v0 = int(np.floor(u)), int(np.floor(v))
                acc = np.zeros(C, dtype=np.float64)
                for dv in (0, 1):
                    for du in (0, 1):
                        i, j = u0 + du, v0 + dv
                        wgt = max(0.0, 1.0 - abs(u - i)) * max(0.0, 1.0 - abs(v - j))
                        if 0 <= i < W and 0 <= j < H:
                            acc += wgt * x[b, :, j, i]
                out[b, :, y, xp] = acc
    return out


# ----------------------------------- main ------------------------------------

if __name__ == "__main__":
    key = jax.random.PRNGKey(0)
    k_x, k_other, k_angle = jax.random.split(key, 3)

    x = jax.random.normal(k_x, (2, 4, 16, 16), jnp.float32)
    other = jax.random.normal(k_other, (2, 4, 16, 16), jnp.float32)

    rotate = Rotate()
    out, other_out = rotate(k_angle, x, other)
    out = jax.block_until_ready(out)
    other_out = jax.block_until_ready(other_out)

    # sanity check against an independent full bilinear-warp reference
    params = rotate.transform.generate_parameters(k_angle, x.shape)
    t = rotate.transform.compute_transformation(x, params)
    ref = _warp_affine_ref(x, t)
    np.testing.assert_allclose(np.asarray(out), ref, atol=1e-4, rtol=1e-4)
    ref_other = _warp_affine_ref(other, t)
    np.testing.assert_allclose(np.asarray(other_out), ref_other, atol=1e-4, rtol=1e-4)

    print("KERNEL_OK")
</pallas_src>

<mosaic_0001>
module attributes {stable_mosaic.version = 11 : i64} {
  func.func @_sep_warp_kernel(%arg0: i32, %arg1: memref<2xi32, #tpu.memory_space<smem>>, %arg2: memref<1x1x8x16x16xf32, #tpu.memory_space<vmem>>, %arg3: memref<1x16x16xf32, #tpu.memory_space<vmem>>, %arg4: memref<1x16x16xf32, #tpu.memory_space<vmem>>, %arg5: memref<1x8x16x16xf32, #tpu.memory_space<vmem>>) attributes {dimension_semantics = [#tpu.dimension_semantics<parallel>], iteration_bounds = array<i64: 2>, scalar_prefetch = 1 : i64, scratch_operands = 0 : i64, tpu.core_type = #tpu.core_type<tc>, window_params = [{transform_indices = @transform_0, window_bounds = array<i64: 1, 1, 8, 16, 16>}, {transform_indices = @transform_1, window_bounds = array<i64: 1, 16, 16>}, {transform_indices = @transform_2, window_bounds = array<i64: 1, 16, 16>}, {transform_indices = @transform_3, window_bounds = array<i64: 1, 8, 16, 16>}]} {
    %c0 = arith.constant 0 : index
    %c0_0 = arith.constant 0 : index
    %c0_1 = arith.constant 0 : index
    %c0_2 = arith.constant 0 : index
    %c0_3 = arith.constant 0 : index
    %0 = vector.load %arg2[%c0, %c0_0, %c0_1, %c0_2, %c0_3] : memref<1x1x8x16x16xf32, #tpu.memory_space<vmem>>, vector<1x1x8x16x16xf32>
    %1 = vector.shape_cast %0 : vector<1x1x8x16x16xf32> to vector<8x16x16xf32>
    %c0_4 = arith.constant 0 : index
    %c0_5 = arith.constant 0 : index
    %c0_6 = arith.constant 0 : index
    %2 = vector.load %arg4[%c0_4, %c0_5, %c0_6] : memref<1x16x16xf32, #tpu.memory_space<vmem>>, vector<1x16x16xf32>
    %3 = vector.shape_cast %2 : vector<1x16x16xf32> to vector<16x16xf32>
    %4 = vector.shape_cast %3 : vector<16x16xf32> to vector<1x16x16xf32>
    %5 = vector.shape_cast %4 : vector<1x16x16xf32> to vector<1x16x16xf32>
    %6 = vector.broadcast %5 : vector<1x16x16xf32> to vector<8x16x16xf32>
    %c0_7 = arith.constant 0 : index
    %c0_8 = arith.constant 0 : index
    %c0_9 = arith.constant 0 : index
    %7 = vector.load %arg3[%c0_7, %c0_8, %c0_9] : memref<1x16x16xf32, #tpu.memory_space<vmem>>, vector<1x16x16xf32>
    %8 = vector.shape_cast %7 : vector<1x16x16xf32> to vector<16x16xf32>
    %9 = vector.shape_cast %8 : vector<16x16xf32> to vector<1x16x16xf32>
    %10 = vector.shape_cast %9 : vector<1x16x16xf32> to vector<1x16x16xf32>
    %11 = vector.broadcast %10 : vector<1x16x16xf32> to vector<8x16x16xf32>
    %cst = arith.constant dense<0.000000e+00> : vector<8x16x16xf32>
    %12 = tpu.matmul %1, %6, %cst {dimension_numbers = #tpu.dot_dimension_numbers<[2], [1], [1], [2], [0, 0, 0, 1, 1, 2], [0], [0]>} : vector<8x16x16xf32>, vector<8x16x16xf32>, vector<8x16x16xf32> -> vector<8x16x16xf32>
    %cst_10 = arith.constant dense<0.000000e+00> : vector<8x16x16xf32>
    %13 = tpu.matmul %11, %12, %cst_10 {dimension_numbers = #tpu.dot_dimension_numbers<[2], [1], [1], [2], [0, 0, 0, 1, 1, 2], [0], [0]>} : vector<8x16x16xf32>, vector<8x16x16xf32>, vector<8x16x16xf32> -> vector<8x16x16xf32>
    %c0_11 = arith.constant 0 : index
    %c0_12 = arith.constant 0 : index
    %c0_13 = arith.constant 0 : index
    %c0_14 = arith.constant 0 : index
    %14 = vector.load %arg5[%c0_11, %c0_12, %c0_13, %c0_14] : memref<1x8x16x16xf32, #tpu.memory_space<vmem>>, vector<1x8x16x16xf32>
    %15 = vector.shape_cast %14 : vector<1x8x16x16xf32> to vector<8x16x16xf32>
    %16 = vector.shape_cast %13 : vector<8x16x16xf32> to vector<1x8x16x16xf32>
    tpu.vector_store %arg5[%c0_11, %c0_12, %c0_13, %c0_14], %16 {strides = array<i32>} : memref<1x8x16x16xf32, #tpu.memory_space<vmem>>, vector<1x8x16x16xf32>,
    return
  }
  func.func @transform_0(%arg0: i32, %arg1: memref<2xi32, #tpu.memory_space<smem>>) -> (i32, i32, i32, i32, i32) {
    %0 = arith.index_cast %arg0 : i32 to index
    %1 = memref.load %arg1[%0] : memref<2xi32, #tpu.memory_space<smem>>
    %c0_i32 = arith.constant 0 : i32
    %c0_i32_0 = arith.constant 0 : i32
    %c0_i32_1 = arith.constant 0 : i32
    %c0_i32_2 = arith.constant 0 : i32
    return %arg0, %1, %c0_i32, %c0_i32_0, %c0_i32_1 : i32, i32, i32, i32, i32
  }
  func.func @transform_1(%arg0: i32, %arg1: memref<2xi32, #tpu.memory_space<smem>>) -> (i32, i32, i32) {
    %c0_i32 = arith.constant 0 : i32
    %c0_i32_0 = arith.constant 0 : i32
    %c0_i32_1 = arith.constant 0 : i32
    return %arg0, %c0_i32, %c0_i32_0 : i32, i32, i32
  }
  func.func @transform_2(%arg0: i32, %arg1: memref<2xi32, #tpu.memory_space<smem>>) -> (i32, i32, i32) {
    %c0_i32 = arith.constant 0 : i32
    %c0_i32_0 = arith.constant 0 : i32
    %c0_i32_1 = arith.constant 0 : i32
    return %arg0, %c0_i32, %c0_i32_0 : i32, i32, i32
  }
  func.func @transform_3(%arg0: i32, %arg1: memref<2xi32, #tpu.memory_space<smem>>) -> (i32, i32, i32, i32) {
    %c0_i32 = arith.constant 0 : i32
    %c0_i32_0 = arith.constant 0 : i32
    %c0_i32_1 = arith.constant 0 : i32
    %c0_i32_2 = arith.constant 0 : i32
    return %arg0, %c0_i32, %c0_i32_0, %c0_i32_1 : i32, i32, i32, i32
  }
}

</mosaic_0001>

<llo_original>
// kernel: tpu_custom_call.1
$region0: #{tpu_custom_call.1}
  #allocation0 [shape = 'u32[]', space=smem, size = 0x4, offset = 0x4, fixed_abs, tag = 'smem constant byte address 0x4 - core index']
  #allocation1 [shape = 'u32[144,128]{1,0:T(1,128)}', space=vmem, size = 0x12000, scoped, tag = 'internal scratch']
  #allocation2 [shape = 's32[1]{0}', space=sflag, size = 0x4, scoped, tag = 'scoped memory for tpu_custom_call.1']
  #allocation3 [shape = 'u8[512]{0}', space=smem, size = 0x200, scoped, tag = 'prefetched SMEM operand 0']
  %s0 = inlined_call_operand.hbm [shape: s32[2], index: 0, kind: input, shape index: {}]
  %s1 = inlined_call_operand.hbm [shape: f32[2,2,8,16,16], index: 1, kind: input, shape index: {}]
  %s2 = inlined_call_operand.hbm [shape: f32[2,16,16], index: 2, kind: input, shape index: {}]
  %s3 = inlined_call_operand.hbm [shape: f32[2,16,16], index: 3, kind: input, shape index: {}]
  %s4 = inlined_call_operand.hbm [shape: f32[2,8,16,16], index: 4, kind: output, shape index: {}]
  %s5 = sld [smem:[#allocation0]]
  $region57: #{tpu_custom_call.1} parent=0
    _
  %s7 = ssub.s32 1, %s5
  %s8 = scalar_select 0, %s7, %s5
  %10 = dma.hbm_to_smem %s0, 16, [#allocation3], [#allocation2]
  %11 = dma.done [#allocation2], 16
  %12 = sfence
  $region1: #{tpu_custom_call.1} parent=0
    #allocation4 [shape = 'u8[131072]{0}', space=vmem, size = 0x20000, scoped, tag = 'input window, operand 1']
    #allocation5 [shape = 's32[2]{0}', space=sflag, size = 0x8, scoped, tag = 'scoped memory for tpu_custom_call.1']
    #allocation6 [shape = 's32[2]{0}', space=sflag, size = 0x8, scoped, tag = 'scoped memory for tpu_custom_call.1']
    #allocation7 [shape = 'u8[16384]{0}', space=vmem, size = 0x4000, scoped, tag = 'input window, operand 2']
    #allocation8 [shape = 's32[2]{0}', space=sflag, size = 0x8, scoped, tag = 'scoped memory for tpu_custom_call.1']
    #allocation9 [shape = 'u8[16384]{0}', space=vmem, size = 0x4000, scoped, tag = 'input window, operand 3']
    #allocation10 [shape = 'u8[131072]{0}', space=vmem, size = 0x20000, scoped, tag = 'output window, operand 0']
    %13 = vsyncpa [#allocation5], 0
    %s14 = scalar_lea.sflag [#allocation5], 1
    %15 = vsyncpa %s14, 0
    %16 = vsyncpa [#allocation8], 0
    %s17 = scalar_lea.sflag [#allocation8], 1
    %18 = vsyncpa %s17, 0
    %19 = vsyncpa [#allocation6], 0
    %s20 = scalar_lea.sflag [#allocation6], 1
    %21 = vsyncpa %s20, 0
    loop: start=0, step=1, limit=4
    $region2: #{tpu_custom_call.1} parent=1 // loop_pre_header
      _
    $region3: #{tpu_custom_call.1} parent=1 // loop_header
      %s23 = sphi 0, %s27
      %p24 = scmp.ge.s32.totalorder %s23, 4
      %s37 = sphi 0, %s39
      %s40 = sphi 0, %s37
      %s41 = sphi 0, %s40
      %s57 = sphi 0, %s41
      %s63 = sphi 0, %s65
      %s66 = sphi 0, %s63
      %s67 = sphi 0, %s66
      %s83 = sphi 0, %s67
      %s89 = sphi 0, %s91
      %s92 = sphi 0, %s89
      %s93 = sphi 0, %s92
      %s109 = sphi 0, %s93
      %s115 = sphi 0, %s117
      %s118 = sphi 0, %s115
      %s119 = sphi 0, %s118
      %s135 = sphi 0, %s119
    $region4: #{tpu_custom_call.1} parent=1 // loop_header_branch
      %26 = sbr.rel (%p24) target = $region8
    $region5: #{tpu_custom_call.1} parent=1 // loop_body
      %s28 = ssub.s32 %s23, 1
      %s29 = ssub.s32 %s23, 2
      %s30 = sadd.s32 %s23, 1
      %s31 = sld [smem:[#allocation3 + %s23]]
      %s32 = sld [smem:[#allocation3 + %s30]]
      %s33 = ssub.s32 %s23, %s30
      %s34 = ssub.s32 %s31, %s32
      %s35 = sor.u32 %s33, %s34
      %p36 = scmp.eq.s32.totalorder %s35, 0
      %s38 = sadd.s32 %s37, 1
      %s39 = scalar_select %p36, %s37, %s38
      %p42 = pneg %p36
      %p43 = scmp.eq.s32.totalorder %s23, 1
      %p44 = por %p42, %p43
      %p45 = scmp.ne.s32.totalorder %s37, %s40
      %p46 = scmp.eq.s32.totalorder %s23, 0
      %p47 = por %p45, %p46
      %p48 = scmp.ne.s32.totalorder %s37, %s40
      %p49 = scmp.eq.s32.totalorder %s28, 1
      %p50 = por %p48, %p49
      %p51 = scmp.ne.s32.totalorder %s40, %s41
      %p52 = scmp.eq.s32.totalorder %s28, 0
      %p53 = por %p51, %p52
      %p54 = scmp.ne.s32.totalorder %s40, %s41
      %p55 = scmp.eq.s32.totalorder %s29, 1
      %p56 = por %p54, %p55
      %p58 = scmp.ne.s32.totalorder %s41, %s57
      %p59 = scmp.eq.s32.totalorder %s29, 0
      %p60 = por %p58, %p59
      %s61 = ssub.s32 %s23, %s30
      %p62 = scmp.eq.s32.totalorder %s61, 0
      %s64 = sadd.s32 %s63, 1
      %s65 = scalar_select %p62, %s63, %s64
      %p68 = pneg %p62
      %p69 = scmp.eq.s32.totalorder %s23, 1
      %p70 = por %p68, %p69
      %p71 = scmp.ne.s32.totalorder %s63, %s66
      %p72 = scmp.eq.s32.totalorder %s23, 0
      %p73 = por %p71, %p72
      %p74 = scmp.ne.s32.totalorder %s63, %s66
      %p75 = scmp.eq.s32.totalorder %s28, 1
      %p76 = por %p74, %p75
      %p77 = scmp.ne.s32.totalorder %s66, %s67
      %p78 = scmp.eq.s32.totalorder %s28, 0
      %p79 = por %p77, %p78
      %p80 = scmp.ne.s32.totalorder %s66, %s67
      %p81 = scmp.eq.s32.totalorder %s29, 1
      %p82 = por %p80, %p81
      %p84 = scmp.ne.s32.totalorder %s67, %s83
      %p85 = scmp.eq.s32.totalorder %s29, 0
      %p86 = por %p84, %p85
      %s87 = ssub.s32 %s23, %s30
      %p88 = scmp.eq.s32.totalorder %s87, 0
      %s90 = sadd.s32 %s89, 1
      %s91 = scalar_select %p88, %s89, %s90
      %p94 = pneg %p88
      %p95 = scmp.eq.s32.totalorder %s23, 1
      %p96 = por %p94, %p95
      %p97 = scmp.ne.s32.totalorder %s89, %s92
      %p98 = scmp.eq.s32.totalorder %s23, 0
      %p99 = por %p97, %p98
      %p100 = scmp.ne.s32.totalorder %s89, %s92
      %p101 = scmp.eq.s32.totalorder %s28, 1
      %p102 = por %p100, %p101
      %p103 = scmp.ne.s32.totalorder %s92, %s93
      %p104 = scmp.eq.s32.totalorder %s28, 0
      %p105 = por %p103, %p104
      %p106 = scmp.ne.s32.totalorder %s92, %s93
      %p107 = scmp.eq.s32.totalorder %s29, 1
      %p108 = por %p106, %p107
      %p110 = scmp.ne.s32.totalorder %s93, %s109
      %p111 = scmp.eq.s32.totalorder %s29, 0
      %p112 = por %p110, %p111
      %s113 = ssub.s32 %s23, %s30
      %p114 = scmp.eq.s32.totalorder %s113, 0
      %s116 = sadd.s32 %s115, 1
      %s117 = scalar_select %p114, %s115, %s116
      %p120 = pneg %p114
      %p121 = scmp.eq.s32.totalorder %s23, 1
      %p122 = por %p120, %p121
      %p123 = scmp.ne.s32.totalorder %s115, %s118
      %p124 = scmp.eq.s32.totalorder %s23, 0
      %p125 = por %p123, %p124
      %p126 = scmp.ne.s32.totalorder %s115, %s118
      %p127 = scmp.eq.s32.totalorder %s28, 1
      %p128 = por %p126, %p127
      %p129 = scmp.ne.s32.totalorder %s118, %s119
      %p130 = scmp.eq.s32.totalorder %s28, 0
      %p131 = por %p129, %p130
      %p132 = scmp.ne.s32.totalorder %s118, %s119
      %p133 = scmp.eq.s32.totalorder %s29, 1
      %p134 = por %p132, %p133
      %p136 = scmp.ne.s32.totalorder %s119, %s135
      %p137 = scmp.eq.s32.totalorder %s29, 0
      %p138 = por %p136, %p137
      %p139 = scmp.le.s32.totalorder 1, %s23
      %p140 = scmp.lt.s32.totalorder %s23, 3
      %p141 = pnand %p139, %p140
      %p142 = pneg %p141
      // Predicated region
      $region9: #{tpu_custom_call.1} parent=5 // pred_check
        _
      $region10: #{tpu_custom_call.1} parent=5 // pred_check_branch
        %144 = sbr.rel (%p141) target = $region12
      $region11: #{tpu_custom_call.1} parent=5 // pred_region
        %s145 = ssub.s32 %s23, 1
      $region12: #{tpu_custom_call.1} parent=5 // pred_fallthru
        _
      %p146 = scmp.lt.s32.totalorder %s23, 2
      // Predicated region
      $region13: #{tpu_custom_call.1} parent=5 // pred_check
        %p147 = pneg %p146
      $region14: #{tpu_custom_call.1} parent=5 // pred_check_branch
        %149 = sbr.rel (%p147) target = $region16
      $region15: #{tpu_custom_call.1} parent=5 // pred_region
        // Predicated region
        $region17: #{tpu_custom_call.1} parent=15 // pred_check
          %p150 = pneg %p47
        $region18: #{tpu_custom_call.1} parent=15 // pred_check_branch
          %152 = sbr.rel (%p150) target = $region20
        $region19: #{tpu_custom_call.1} parent=15 // pred_region
          %s153 = sand.u32 %s37, 1
          %s154 = scalar_lea.sflag [#allocation5], %s153
          %s155 = sand.u32 %s37, 1
          %s156 = smul.addr %s155, 128
          %s157 = scalar_lea.vmem [#allocation4], %s156
          %s158 = sld [smem:[#allocation3 + %s23]]
          %s160 = ssub.s32 2048, 2048
          %161 = vsyncadd %s154, %s160
          %s162 = smul.addr %s158, 16
          %s163 = smul.addr %s23, 32
          %s164 = sadd.s32 %s162, %s163
          %s165 = smul.addr %s164, 128
          %s166 = scalar_lea.hbm %s1, %s165
          %s167 = sshll.u32 %s157, 4
          %s168 = int_to_ptr.vmem [resolvable:$true] %s167
          %173 = dma.hbm_to_vmem [thread:$0]  %s166, 2048, %s168, %s154, 128, 128, 8
        $region20: #{tpu_custom_call.1} parent=15 // pred_fallthru
          _
        // Predicated region
        $region21: #{tpu_custom_call.1} parent=15 // pred_check
          %p174 = pneg %p73
        $region22: #{tpu_custom_call.1} parent=15 // pred_check_branch
          %176 = sbr.rel (%p174) target = $region24
        $region23: #{tpu_custom_call.1} parent=15 // pred_region
          %s177 = sand.u32 %s23, 1
          %s178 = scalar_lea.sflag [#allocation8], %s177
          %s179 = sand.u32 %s63, 1
          %s180 = smul.addr %s179, 16
          %s181 = scalar_lea.vmem [#allocation7], %s180
          %s183 = ssub.s32 256, 256
          %184 = vsyncadd %s178, %s183
          %s185 = smul.addr %s23, 2
          %s186 = smul.addr %s185, 128
          %s187 = scalar_lea.hbm %s2, %s186
          %s188 = sshll.u32 %s181, 4
          %s189 = int_to_ptr.vmem [resolvable:$true] %s188
          %194 = dma.hbm_to_vmem [thread:$0]  %s187, 256, %s189, %s178, 128, 128, 8
        $region24: #{tpu_custom_call.1} parent=15 // pred_fallthru
          _
        // Predicated region
        $region25: #{tpu_custom_call.1} parent=15 // pred_check
          %p195 = pneg %p99
        $region26: #{tpu_custom_call.1} parent=15 // pred_check_branch
          %197 = sbr.rel (%p195) target = $region28
        $region27: #{tpu_custom_call.1} parent=15 // pred_region
          %s198 = sand.u32 %s23, 1
          %s199 = scalar_lea.sflag [#allocation8], %s198
          %s200 = sand.u32 %s89, 1
          %s201 = smul.addr %s200, 16
          %s202 = scalar_lea.vmem [#allocation9], %s201
          %s204 = ssub.s32 256, 256
          %205 = vsyncadd %s199, %s204
          %s206 = smul.addr %s23, 2
          %s207 = smul.addr %s206, 128
          %s208 = scalar_lea.hbm %s3, %s207
          %s209 = sshll.u32 %s202, 4
          %s210 = int_to_ptr.vmem [resolvable:$true] %s209
          %215 = dma.hbm_to_vmem [thread:$0]  %s208, 256, %s210, %s199, 128, 128, 8
        $region28: #{tpu_custom_call.1} parent=15 // pred_fallthru
          _
      $region16: #{tpu_custom_call.1} parent=5 // pred_fallthru
        _
      %p216 = scmp.le.s32.totalorder 1, %s23
      %p217 = scmp.lt.s32.totalorder %s23, 3
      %p218 = pnand %p216, %p217
      %p219 = pneg %p218
      // Predicated region
      $region29: #{tpu_custom_call.1} parent=5 // pred_check
        _
      $region30: #{tpu_custom_call.1} parent=5 // pred_check_branch
        %221 = sbr.rel (%p218) target = $region32
      $region31: #{tpu_custom_call.1} parent=5 // pred_region
        %s222 = ssub.s32 %s23, 1
        %s223 = sand.u32 %s40, 1
        %s224 = scalar_lea.sflag [#allocation5], %s223
        %s225 = sand.u32 %s40, 1
        %s226 = smul.addr %s225, 128
        %s227 = scalar_lea.vmem [#allocation4], %s226
        // Predicated region
        $region33: #{tpu_custom_call.1} parent=31 // pred_check
          %p228 = pneg %p53
        $region34: #{tpu_custom_call.1} parent=31 // pred_check_branch
          %230 = sbr.rel (%p228) target = $region36
        $region35: #{tpu_custom_call.1} parent=31 // pred_region
          %231 = dma.done %s224, 2048
        $region36: #{tpu_custom_call.1} parent=31 // pred_fallthru
          _
        %s232 = sand.u32 %s28, 1
        %s233 = scalar_lea.sflag [#allocation8], %s232
        %s234 = sand.u32 %s66, 1
        %s235 = smul.addr %s234, 16
        %s236 = scalar_lea.vmem [#allocation7], %s235
        // Predicated region
        $region37: #{tpu_custom_call.1} parent=31 // pred_check
          %p237 = pneg %p79
        $region38: #{tpu_custom_call.1} parent=31 // pred_check_branch
          %239 = sbr.rel (%p237) target = $region40
        $region39: #{tpu_custom_call.1} parent=31 // pred_region
          %240 = dma.done %s233, 256
        $region40: #{tpu_custom_call.1} parent=31 // pred_fallthru
          _
        %s241 = sand.u32 %s28, 1
        %s242 = scalar_lea.sflag [#allocation8], %s241
        %s243 = sand.u32 %s92, 1
        %s244 = smul.addr %s243, 16
        %s245 = scalar_lea.vmem [#allocation9], %s244
        // Predicated region
        $region41: #{tpu_custom_call.1} parent=31 // pred_check
          %p246 = pneg %p105
        $region42: #{tpu_custom_call.1} parent=31 // pred_check_branch
          %248 = sbr.rel (%p246) target = $region44
        $region43: #{tpu_custom_call.1} parent=31 // pred_region
          %249 = dma.done %s242, 256
        $region44: #{tpu_custom_call.1} parent=31 // pred_fallthru
          _
        %s250 = sand.u32 %s40, 1
        %s251 = scalar_lea.sflag [#allocation5], %s250
        %s252 = sand.u32 %s40, 1
        %s253 = smul.addr %s252, 128
        %s254 = scalar_lea.vmem [#allocation4], %s253
        %p255 = pneg %p53
        %p256 = pneg %p50
        %s257 = sand.u32 %s28, 1
        %s258 = scalar_lea.sflag [#allocation8], %s257
        %s259 = sand.u32 %s66, 1
        %s260 = smul.addr %s259, 16
        %s261 = scalar_lea.vmem [#allocation7], %s260
        %p262 = pneg %p79
        %p263 = pneg %p76
        %s264 = sand.u32 %s28, 1
        %s265 = scalar_lea.sflag [#allocation8], %s264
        %s266 = sand.u32 %s92, 1
        %s267 = smul.addr %s266, 16
        %s268 = scalar_lea.vmem [#allocation9], %s267
        %p269 = pneg %p105
        %p270 = pneg %p102
        %p271 = pneg %p131
        %p272 = pneg %p128
        %s273 = sand.u32 %s118, 1
        %s274 = scalar_lea.sflag [#allocation6], %s273
        %s275 = sand.u32 %s118, 1
        %s276 = smul.addr %s275, 128
        %s277 = scalar_lea.vmem [#allocation10], %s276
        %s278 = sld [smem:[#allocation3 + %s28]]
        %v279 = vld [vmem:[%s227] sm:$0xff]
        %v280 = vld [vmem:[%s227 + $0x8] sm:$0xff]
        %v281 = vld [vmem:[%s227 + $0x10] sm:$0xff]
        %v282 = vld [vmem:[%s227 + $0x18] sm:$0xff]
        %v283 = vld [vmem:[%s227 + $0x20] sm:$0xff]
        %v284 = vld [vmem:[%s227 + $0x28] sm:$0xff]
        %v285 = vld [vmem:[%s227 + $0x30] sm:$0xff]
        %v286 = vld [vmem:[%s227 + $0x38] sm:$0xff]
        %v287 = vld [vmem:[%s227 + $0x40] sm:$0xff]
        %v288 = vld [vmem:[%s227 + $0x48] sm:$0xff]
        %v289 = vld [vmem:[%s227 + $0x50] sm:$0xff]
        %v290 = vld [vmem:[%s227 + $0x58] sm:$0xff]
        %v291 = vld [vmem:[%s227 + $0x60] sm:$0xff]
        %v292 = vld [vmem:[%s227 + $0x68] sm:$0xff]
        %v293 = vld [vmem:[%s227 + $0x70] sm:$0xff]
        %v294 = vld [vmem:[%s227 + $0x78] sm:$0xff]
        %v295 = vld [vmem:[%s245] sm:$0xff]
        %v296 = vld [vmem:[%s245 + $0x8] sm:$0xff]
        %v297 = vld [vmem:[%s236] sm:$0xff]
        %v298 = vld [vmem:[%s236 + $0x8] sm:$0xff]
        %vm299 = vcmask 130048
        %v301 = vsel %vm299, %v279, 0
        %v304 = vsel %vm299, %v280, 0
        %306 = vmatprep.subr.mxu0 0.0
        %307 = vmatpush1.msra.mxu0 %v295
        %308 = vmatprep.subr.mxu0 0.0
        %309 = vmatpush1.msra.mxu0 %v296
        %310 = vmatprep.subr.mxu0 0.0
        %311 = vmatpush1.msra.mxu0 0.0
        %312 = vmatprep.subr.mxu0 0.0
        %313 = vmatpush1.msra.mxu0 0.0
        %314 = vmatprep.subr.mxu0 0.0
        %315 = vmatpush1.msra.mxu0 0.0
        %316 = vmatprep.subr.mxu0 0.0
        %317 = vmatpush1.msra.mxu0 0.0
        %318 = vmatprep.subr.mxu0 0.0
        %319 = vmatpush1.msra.mxu0 0.0
        %320 = vmatprep.subr.mxu0 0.0
        %321 = vmatpush1.msra.mxu0 0.0
        %322 = vmatprep.subr.mxu0 0.0
        %323 = vmatpush1.msra.mxu0 0.0
        %324 = vmatprep.subr.mxu0 0.0
        %325 = vmatpush1.msra.mxu0 0.0
        %326 = vmatprep.subr.mxu0 0.0
        %327 = vmatpush1.msra.mxu0 0.0
        %328 = vmatprep.subr.mxu0 0.0
        %329 = vmatpush1.msra.mxu0 0.0
        %330 = vmatprep.subr.mxu0 0.0
        %331 = vmatpush1.msra.mxu0 0.0
        %332 = vmatprep.subr.mxu0 0.0
        %333 = vmatpush1.msra.mxu0 0.0
        %334 = vmatprep.subr.mxu0 0.0
        %335 = vmatpush1.msra.mxu0 0.0
        %336 = vmatprep.subr.mxu0 0.0
        %337 = vmatpush1.msra.mxu0 0.0
        %338 = vmatprep.subr.mxu0 0.0
        %339 = vmatpush1.msra.mxu0 0.0
        %340 = vmatprep.subr.mxu0 0.0
        %341 = vmatpush1.msra.mxu0 0.0
        %342 = vmatprep.subr.mxu0 0.0
        %343 = vmatpush1.msra.mxu0 0.0
        %344 = vmatprep.subr.mxu0 0.0
        %345 = vmatpush1.msra.mxu0 0.0
        %346 = vmatprep.subr.mxu0 0.0
        %347 = vmatpush1.msra.mxu0 0.0
        %348 = vmatprep.subr.mxu0 0.0
        %349 = vmatpush1.msra.mxu0 0.0
        %350 = vmatprep.subr.mxu0 0.0
        %351 = vmatpush1.msra.mxu0 0.0
        %352 = vmatprep.subr.mxu0 0.0
        %353 = vmatpush1.msra.mxu0 0.0
        %354 = vmatprep.subr.mxu0 0.0
        %355 = vmatpush1.msra.mxu0 0.0
        %356 = vmatprep.subr.mxu0 0.0
        %357 = vmatpush1.msra.mxu0 0.0
        %358 = vmatprep.subr.mxu0 0.0
        %359 = vmatpush1.msra.mxu0 0.0
        %360 = vmatprep.subr.mxu0 0.0
        %361 = vmatpush1.msra.mxu0 0.0
        %362 = vmatprep.subr.mxu0 0.0
        %363 = vmatpush1.msra.mxu0 0.0
        %364 = vmatprep.subr.mxu0 0.0
        %365 = vmatpush1.msra.mxu0 0.0
        %366 = vmatprep.subr.mxu0 0.0
        %367 = vmatpush1.msra.mxu0 0.0
        %368 = vmatprep.subr.mxu0 0.0
        %369 = vmatpush1.msra.mxu0 0.0
        %370 = vmatprep.mubr.f32.mxu0 0.0
        %371 = vmatmul.mubr.f32.gmra.mrb[0].mxu0 %v301
        %v372 = vpop.f32.mrb[0].mxu0
        %v373 = vadd.f32 0.0, %v372
        %v374 = vpop.f32.mrb[0].mxu0
        %375 = vmatprep.mubr.f32.mxu0 0.0
        %376 = vmatmul.mubr.f32.gmra.mrb[0].mxu0 %v304
        %v377 = vpop.f32.mrb[0].mxu0
        %v378 = vadd.f32 0.0, %v377
        %v379 = vpop.f32.mrb[0].mxu0
        %380 = vdwg.mxu0
        %v382 = vsel %vm299, %v281, 0
        %v385 = vsel %vm299, %v282, 0
        %387 = vmatprep.subr.mxu0 0.0
        %388 = vmatpush1.msra.mxu0 %v295
        %389 = vmatprep.subr.mxu0 0.0
        %390 = vmatpush1.msra.mxu0 %v296
        %391 = vmatprep.subr.mxu0 0.0
        %392 = vmatpush1.msra.mxu0 0.0
        %393 = vmatprep.subr.mxu0 0.0
        %394 = vmatpush1.msra.mxu0 0.0
        %395 = vmatprep.subr.mxu0 0.0
        %396 = vmatpush1.msra.mxu0 0.0
        %397 = vmatprep.subr.mxu0 0.0
        %398 = vmatpush1.msra.mxu0 0.0
        %399 = vmatprep.subr.mxu0 0.0
        %400 = vmatpush1.msra.mxu0 0.0
        %401 = vmatprep.subr.mxu0 0.0
        %402 = vmatpush1.msra.mxu0 0.0
        %403 = vmatprep.subr.mxu0 0.0
        %404 = vmatpush1.msra.mxu0 0.0
        %405 = vmatprep.subr.mxu0 0.0
        %406 = vmatpush1.msra.mxu0 0.0
        %407 = vmatprep.subr.mxu0 0.0
        %408 = vmatpush1.msra.mxu0 0.0
        %409 = vmatprep.subr.mxu0 0.0
        %410 = vmatpush1.msra.mxu0 0.0
        %411 = vmatprep.subr.mxu0 0.0
        %412 = vmatpush1.msra.mxu0 0.0
        %413 = vmatprep.subr.mxu0 0.0
        %414 = vmatpush1.msra.mxu0 0.0
        %415 = vmatprep.subr.mxu0 0.0
        %416 = vmatpush1.msra.mxu0 0.0
        %417 = vmatprep.subr.mxu0 0.0
        %418 = vmatpush1.msra.mxu0 0.0
        %419 = vmatprep.subr.mxu0 0.0
        %420 = vmatpush1.msra.mxu0 0.0
        %421 = vmatprep.subr.mxu0 0.0
        %422 = vmatpush1.msra.mxu0 0.0
        %423 = vmatprep.subr.mxu0 0.0
        %424 = vmatpush1.msra.mxu0 0.0
        %425 = vmatprep.subr.mxu0 0.0
        %426 = vmatpush1.msra.mxu0 0.0
        %427 = vmatprep.subr.mxu0 0.0
        %428 = vmatpush1.msra.mxu0 0.0
        %429 = vmatprep.subr.mxu0 0.0
        %430 = vmatpush1.msra.mxu0 0.0
        %431 = vmatprep.subr.mxu0 0.0
        %432 = vmatpush1.msra.mxu0 0.0
        %433 = vmatprep.subr.mxu0 0.0
        %434 = vmatpush1.msra.mxu0 0.0
        %435 = vmatprep.subr.mxu0 0.0
        %436 = vmatpush1.msra.mxu0 0.0
        %437 = vmatprep.subr.mxu0 0.0
        %438 = vmatpush1.msra.mxu0 0.0
        %439 = vmatprep.subr.mxu0 0.0
        %440 = vmatpush1.msra.mxu0 0.0
        %441 = vmatprep.subr.mxu0 0.0
        %442 = vmatpush1.msra.mxu0 0.0
        %443 = vmatprep.subr.mxu0 0.0
        %444 = vmatpush1.msra.mxu0 0.0
        %445 = vmatprep.subr.mxu0 0.0
        %446 = vmatpush1.msra.mxu0 0.0
        %447 = vmatprep.subr.mxu0 0.0
        %448 = vmatpush1.msra.mxu0 0.0
        %449 = vmatprep.subr.mxu0 0.0
        %450 = vmatpush1.msra.mxu0 0.0
        %451 = vmatprep.mubr.f32.mxu0 0.0
        %452 = vmatmul.mubr.f32.gmra.mrb[0].mxu0 %v382
        %v453 = vpop.f32.mrb[0].mxu0
        %v454 = vadd.f32 0.0, %v453
        %v455 = vpop.f32.mrb[0].mxu0
        %456 = vmatprep.mubr.f32.mxu0 0.0
        %457 = vmatmul.mubr.f32.gmra.mrb[0].mxu0 %v385
        %v458 = vpop.f32.mrb[0].mxu0
        %v459 = vadd.f32 0.0, %v458
        %v460 = vpop.f32.mrb[0].mxu0
        %461 = vdwg.mxu0
        %v463 = vsel %vm299, %v283, 0
        %v466 = vsel %vm299, %v284, 0
        %468 = vmatprep.subr.mxu0 0.0
        %469 = vmatpush1.msra.mxu0 %v295
        %470 = vmatprep.subr.mxu0 0.0
        %471 = vmatpush1.msra.mxu0 %v296
        %472 = vmatprep.subr.mxu0 0.0
        %473 = vmatpush1.msra.mxu0 0.0
        %474 = vmatprep.subr.mxu0 0.0
        %475 = vmatpush1.msra.mxu0 0.0
        %476 = vmatprep.subr.mxu0 0.0
        %477 = vmatpush1.msra.mxu0 0.0
        %478 = vmatprep.subr.mxu0 0.0
        %479 = vmatpush1.msra.mxu0 0.0
        %480 = vmatprep.subr.mxu0 0.0
        %481 = vmatpush1.msra.mxu0 0.0
        %482 = vmatprep.subr.mxu0 0.0
        %483 = vmatpush1.msra.mxu0 0.0
        %484 = vmatprep.subr.mxu0 0.0
        %485 = vmatpush1.msra.mxu0 0.0
        %486 = vmatprep.subr.mxu0 0.0
        %487 = vmatpush1.msra.mxu0 0.0
        %488 = vmatprep.subr.mxu0 0.0
        %489 = vmatpush1.msra.mxu0 0.0
        %490 = vmatprep.subr.mxu0 0.0
        %491 = vmatpush1.msra.mxu0 0.0
        %492 = vmatprep.subr.mxu0 0.0
        %493 = vmatpush1.msra.mxu0 0.0
        %494 = vmatprep.subr.mxu0 0.0
        %495 = vmatpush1.msra.mxu0 0.0
        %496 = vmatprep.subr.mxu0 0.0
        %497 = vmatpush1.msra.mxu0 0.0
        %498 = vmatprep.subr.mxu0 0.0
        %499 = vmatpush1.msra.mxu0 0.0
        %500 = vmatprep.subr.mxu0 0.0
        %501 = vmatpush1.msra.mxu0 0.0
        %502 = vmatprep.subr.mxu0 0.0
        %503 = vmatpush1.msra.mxu0 0.0
        %504 = vmatprep.subr.mxu0 0.0
        %505 = vmatpush1.msra.mxu0 0.0
        %506 = vmatprep.subr.mxu0 0.0
        %507 = vmatpush1.msra.mxu0 0.0
        %508 = vmatprep.subr.mxu0 0.0
        %509 = vmatpush1.msra.mxu0 0.0
        %510 = vmatprep.subr.mxu0 0.0
        %511 = vmatpush1.msra.mxu0 0.0
        %512 = vmatprep.subr.mxu0 0.0
        %513 = vmatpush1.msra.mxu0 0.0
        %514 = vmatprep.subr.mxu0 0.0
        %515 = vmatpush1.msra.mxu0 0.0
        %516 = vmatprep.subr.mxu0 0.0
        %517 = vmatpush1.msra.mxu0 0.0
        %518 = vmatprep.subr.mxu0 0.0
        %519 = vmatpush1.msra.mxu0 0.0
        %520 = vmatprep.subr.mxu0 0.0
        %521 = vmatpush1.msra.mxu0 0.0
        %522 = vmatprep.subr.mxu0 0.0
        %523 = vmatpush1.msra.mxu0 0.0
        %524 = vmatprep.subr.mxu0 0.0
        %525 = vmatpush1.msra.mxu0 0.0
        %526 = vmatprep.subr.mxu0 0.0
        %527 = vmatpush1.msra.mxu0 0.0
        %528 = vmatprep.subr.mxu0 0.0
        %529 = vmatpush1.msra.mxu0 0.0
        %530 = vmatprep.subr.mxu0 0.0
        %531 = vmatpush1.msra.mxu0 0.0
        %532 = vmatprep.mubr.f32.mxu0 0.0
        %533 = vmatmul.mubr.f32.gmra.mrb[0].mxu0 %v463
        %v534 = vpop.f32.mrb[0].mxu0
        %v535 = vadd.f32 0.0, %v534
        %v536 = vpop.f32.mrb[0].mxu0
        %537 = vmatprep.mubr.f32.mxu0 0.0
        %538 = vmatmul.mubr.f32.gmra.mrb[0].mxu0 %v466
        %v539 = vpop.f32.mrb[0].mxu0
        %v540 = vadd.f32 0.0, %v539
        %v541 = vpop.f32.mrb[0].mxu0
        %542 = vdwg.mxu0
        %v544 = vsel %vm299, %v285, 0
        %v547 = vsel %vm299, %v286, 0
        %549 = vmatprep.subr.mxu0 0.0
        %550 = vmatpush1.msra.mxu0 %v295
        %551 = vmatprep.subr.mxu0 0.0
        %552 = vmatpush1.msra.mxu0 %v296
        %553 = vmatprep.subr.mxu0 0.0
        %554 = vmatpush1.msra.mxu0 0.0
        %555 = vmatprep.subr.mxu0 0.0
        %556 = vmatpush1.msra.mxu0 0.0
        %557 = vmatprep.subr.mxu0 0.0
        %558 = vmatpush1.msra.mxu0 0.0
        %559 = vmatprep.subr.mxu0 0.0
        %560 = vmatpush1.msra.mxu0 0.0
        %561 = vmatprep.subr.mxu0 0.0
        %562 = vmatpush1.msra.mxu0 0.0
        %563 = vmatprep.subr.mxu0 0.0
        %564 = vmatpush1.msra.mxu0 0.0
        %565 = vmatprep.subr.mxu0 0.0
        %566 = vmatpush1.msra.mxu0 0.0
        %567 = vmatprep.subr.mxu0 0.0
        %568 = vmatpush1.msra.mxu0 0.0
        %569 = vmatprep.subr.mxu0 0.0
        %570 = vmatpush1.msra.mxu0 0.0
        %571 = vmatprep.subr.mxu0 0.0
        %572 = vmatpush1.msra.mxu0 0.0
        %573 = vmatprep.subr.mxu0 0.0
        %574 = vmatpush1.msra.mxu0 0.0
        %575 = vmatprep.subr.mxu0 0.0
        %576 = vmatpush1.msra.mxu0 0.0
        %577 = vmatprep.subr.mxu0 0.0
        %578 = vmatpush1.msra.mxu0 0.0
        %579 = vmatprep.subr.mxu0 0.0
        %580 = vmatpush1.msra.mxu0 0.0
        %581 = vmatprep.subr.mxu0 0.0
        %582 = vmatpush1.msra.mxu0 0.0
        %583 = vmatprep.subr.mxu0 0.0
        %584 = vmatpush1.msra.mxu0 0.0
        %585 = vmatprep.subr.mxu0 0.0
        %586 = vmatpush1.msra.mxu0 0.0
        %587 = vmatprep.subr.mxu0 0.0
        %588 = vmatpush1.msra.mxu0 0.0
        %589 = vmatprep.subr.mxu0 0.0
        %590 = vmatpush1.msra.mxu0 0.0
        %591 = vmatprep.subr.mxu0 0.0
        %592 = vmatpush1.msra.mxu0 0.0
        %593 = vmatprep.subr.mxu0 0.0
        %594 = vmatpush1.msra.mxu0 0.0
        %595 = vmatprep.subr.mxu0 0.0
        %596 = vmatpush1.msra.mxu0 0.0
        %597 = vmatprep.subr.mxu0 0.0
        %598 = vmatpush1.msra.mxu0 0.0
        %599 = vmatprep.subr.mxu0 0.0
        %600 = vmatpush1.msra.mxu0 0.0
        %601 = vmatprep.subr.mxu0 0.0
        %602 = vmatpush1.msra.mxu0 0.0
        %603 = vmatprep.subr.mxu0 0.0
        %604 = vmatpush1.msra.mxu0 0.0
        %605 = vmatprep.subr.mxu0 0.0
        %606 = vmatpush1.msra.mxu0 0.0
        %607 = vmatprep.subr.mxu0 0.0
        %608 = vmatpush1.msra.mxu0 0.0
        %609 = vmatprep.subr.mxu0 0.0
        %610 = vmatpush1.msra.mxu0 0.0
        %611 = vmatprep.subr.mxu0 0.0
        %612 = vmatpush1.msra.mxu0 0.0
        %613 = vmatprep.mubr.f32.mxu0 0.0
        %614 = vmatmul.mubr.f32.gmra.mrb[0].mxu0 %v544
        %v615 = vpop.f32.mrb[0].mxu0
        %v616 = vadd.f32 0.0, %v615
        %v617 = vpop.f32.mrb[0].mxu0
        %618 = vmatprep.mubr.f32.mxu0 0.0
        %619 = vmatmul.mubr.f32.gmra.mrb[0].mxu0 %v547
        %v620 = vpop.f32.mrb[0].mxu0
        %v621 = vadd.f32 0.0, %v620
        %v622 = vpop.f32.mrb[0].mxu0
        %623 = vdwg.mxu0
        %v625 = vsel %vm299, %v287, 0
        %v628 = vsel %vm299, %v288, 0
        %630 = vmatprep.subr.mxu0 0.0
        %631 = vmatpush1.msra.mxu0 %v295
        %632 = vmatprep.subr.mxu0 0.0
        %633 = vmatpush1.msra.mxu0 %v296
        %634 = vmatprep.subr.mxu0 0.0
        %635 = vmatpush1.msra.mxu0 0.0
        %636 = vmatprep.subr.mxu0 0.0
        %637 = vmatpush1.msra.mxu0 0.0
        %638 = vmatprep.subr.mxu0 0.0
        %639 = vmatpush1.msra.mxu0 0.0
        %640 = vmatprep.subr.mxu0 0.0
        %641 = vmatpush1.msra.mxu0 0.0
        %642 = vmatprep.subr.mxu0 0.0
        %643 = vmatpush1.msra.mxu0 0.0
        %644 = vmatprep.subr.mxu0 0.0
        %645 = vmatpush1.msra.mxu0 0.0
        %646 = vmatprep.subr.mxu0 0.0
        %647 = vmatpush1.msra.mxu0 0.0
        %648 = vmatprep.subr.mxu0 0.0
        %649 = vmatpush1.msra.mxu0 0.0
        %650 = vmatprep.subr.mxu0 0.0
        %651 = vmatpush1.msra.mxu0 0.0
        %652 = vmatprep.subr.mxu0 0.0
        %653 = vmatpush1.msra.mxu0 0.0
        %654 = vmatprep.subr.mxu0 0.0
        %655 = vmatpush1.msra.mxu0 0.0
        %656 = vmatprep.subr.mxu0 0.0
        %657 = vmatpush1.msra.mxu0 0.0
        %658 = vmatprep.subr.mxu0 0.0
        %659 = vmatpush1.msra.mxu0 0.0
        %660 = vmatprep.subr.mxu0 0.0
        %661 = vmatpush1.msra.mxu0 0.0
        %662 = vmatprep.subr.mxu0 0.0
        %663 = vmatpush1.msra.mxu0 0.0
        %664 = vmatprep.subr.mxu0 0.0
        %665 = vmatpush1.msra.mxu0 0.0
        %666 = vmatprep.subr.mxu0 0.0
        %667 = vmatpush1.msra.mxu0 0.0
        %668 = vmatprep.subr.mxu0 0.0
        %669 = vmatpush1.msra.mxu0 0.0
        %670 = vmatprep.subr.mxu0 0.0
        %671 = vmatpush1.msra.mxu0 0.0
        %672 = vmatprep.subr.mxu0 0.0
        %673 = vmatpush1.msra.mxu0 0.0
        %674 = vmatprep.subr.mxu0 0.0
        %675 = vmatpush1.msra.mxu0 0.0
        %676 = vmatprep.subr.mxu0 0.0
        %677 = vmatpush1.msra.mxu0 0.0
        %678 = vmatprep.subr.mxu0 0.0
        %679 = vmatpush1.msra.mxu0 0.0
        %680 = vmatprep.subr.mxu0 0.0
        %681 = vmatpush1.msra.mxu0 0.0
        %682 = vmatprep.subr.mxu0 0.0
        %683 = vmatpush1.msra.mxu0 0.0
        %684 = vmatprep.subr.mxu0 0.0
        %685 = vmatpush1.msra.mxu0 0.0
        %686 = vmatprep.subr.mxu0 0.0
        %687 = vmatpush1.msra.mxu0 0.0
        %688 = vmatprep.subr.mxu0 0.0
        %689 = vmatpush1.msra.mxu0 0.0
        %690 = vmatprep.subr.mxu0 0.0
        %691 = vmatpush1.msra.mxu0 0.0
        %692 = vmatprep.subr.mxu0 0.0
        %693 = vmatpush1.msra.mxu0 0.0
        %694 = vmatprep.mubr.f32.mxu0 0.0
        %695 = vmatmul.mubr.f32.gmra.mrb[0].mxu0 %v625
        %v696 = vpop.f32.mrb[0].mxu0
        %v697 = vadd.f32 0.0, %v696
        %v698 = vpop.f32.mrb[0].mxu0
        %699 = vmatprep.mubr.f32.mxu0 0.0
        %700 = vmatmul.mubr.f32.gmra.mrb[0].mxu0 %v628
        %v701 = vpop.f32.mrb[0].mxu0
        %v702 = vadd.f32 0.0, %v701
        %v703 = vpop.f32.mrb[0].mxu0
        %704 = vdwg.mxu0
        %v706 = vsel %vm299, %v289, 0
        %v709 = vsel %vm299, %v290, 0
        %711 = vmatprep.subr.mxu0 0.0
        %712 = vmatpush1.msra.mxu0 %v295
        %713 = vmatprep.subr.mxu0 0.0
        %714 = vmatpush1.msra.mxu0 %v296
        %715 = vmatprep.subr.mxu0 0.0
        %716 = vmatpush1.msra.mxu0 0.0
        %717 = vmatprep.subr.mxu0 0.0
        %718 = vmatpush1.msra.mxu0 0.0
        %719 = vmatprep.subr.mxu0 0.0
        %720 = vmatpush1.msra.mxu0 0.0
        %721 = vmatprep.subr.mxu0 0.0
        %722 = vmatpush1.msra.mxu0 0.0
        %723 = vmatprep.subr.mxu0 0.0
        %724 = vmatpush1.msra.mxu0 0.0
        %725 = vmatprep.subr.mxu0 0.0
        %726 = vmatpush1.msra.mxu0 0.0
        %727 = vmatprep.subr.mxu0 0.0
        %728 = vmatpush1.msra.mxu0 0.0
        %729 = vmatprep.subr.mxu0 0.0
        %730 = vmatpush1.msra.mxu0 0.0
        %731 = vmatprep.subr.mxu0 0.0
        %732 = vmatpush1.msra.mxu0 0.0
        %733 = vmatprep.subr.mxu0 0.0
        %734 = vmatpush1.msra.mxu0 0.0
        %735 = vmatprep.subr.mxu0 0.0
        %736 = vmatpush1.msra.mxu0 0.0
        %737 = vmatprep.subr.mxu0 0.0
        %738 = vmatpush1.msra.mxu0 0.0
        %739 = vmatprep.subr.mxu0 0.0
        %740 = vmatpush1.msra.mxu0 0.0
        %741 = vmatprep.subr.mxu0 0.0
        %742 = vmatpush1.msra.mxu0 0.0
        %743 = vmatprep.subr.mxu0 0.0
        %744 = vmatpush1.msra.mxu0 0.0
        %745 = vmatprep.subr.mxu0 0.0
        %746 = vmatpush1.msra.mxu0 0.0
        %747 = vmatprep.subr.mxu0 0.0
        %748 = vmatpush1.msra.mxu0 0.0
        %749 = vmatprep.subr.mxu0 0.0
        %750 = vmatpush1.msra.mxu0 0.0
        %751 = vmatprep.subr.mxu0 0.0
        %752 = vmatpush1.msra.mxu0 0.0
        %753 = vmatprep.subr.mxu0 0.0
        %754 = vmatpush1.msra.mxu0 0.0
        %755 = vmatprep.subr.mxu0 0.0
        %756 = vmatpush1.msra.mxu0 0.0
        %757 = vmatprep.subr.mxu0 0.0
        %758 = vmatpush1.msra.mxu0 0.0
        %759 = vmatprep.subr.mxu0 0.0
        %760 = vmatpush1.msra.mxu0 0.0
        %761 = vmatprep.subr.mxu0 0.0
        %762 = vmatpush1.msra.mxu0 0.0
        %763 = vmatprep.subr.mxu0 0.0
        %764 = vmatpush1.msra.mxu0 0.0
        %765 = vmatprep.subr.mxu0 0.0
        %766 = vmatpush1.msra.mxu0 0.0
        %767 = vmatprep.subr.mxu0 0.0
        %768 = vmatpush1.msra.mxu0 0.0
        %769 = vmatprep.subr.mxu0 0.0
        %770 = vmatpush1.msra.mxu0 0.0
        %771 = vmatprep.subr.mxu0 0.0
        %772 = vmatpush1.msra.mxu0 0.0
        %773 = vmatprep.subr.mxu0 0.0
        %774 = vmatpush1.msra.mxu0 0.0
        %775 = vmatprep.mubr.f32.mxu0 0.0
        %776 = vmatmul.mubr.f32.gmra.mrb[0].mxu0 %v706
        %v777 = vpop.f32.mrb[0].mxu0
        %v778 = vadd.f32 0.0, %v777
        %v779 = vpop.f32.mrb[0].mxu0
        %780 = vmatprep.mubr.f32.mxu0 0.0
        %781 = vmatmul.mubr.f32.gmra.mrb[0].mxu0 %v709
        %v782 = vpop.f32.mrb[0].mxu0
        %v783 = vadd.f32 0.0, %v782
        %v784 = vpop.f32.mrb[0].mxu0
        %785 = vdwg.mxu0
        %v787 = vsel %vm299, %v291, 0
        %v790 = vsel %vm299, %v292, 0
        %792 = vmatprep.subr.mxu0 0.0
        %793 = vmatpush1.msra.mxu0 %v295
        %794 = vmatprep.subr.mxu0 0.0
        %795 = vmatpush1.msra.mxu0 %v296
        %796 = vmatprep.subr.mxu0 0.0
        %797 = vmatpush1.msra.mxu0 0.0
        %798 = vmatprep.subr.mxu0 0.0
        %799 = vmatpush1.msra.mxu0 0.0
        %800 = vmatprep.subr.mxu0 0.0
        %801 = vmatpush1.msra.mxu0 0.0
        %802 = vmatprep.subr.mxu0 0.0
        %803 = vmatpush1.msra.mxu0 0.0
        %804 = vmatprep.subr.mxu0 0.0
        %805 = vmatpush1.msra.mxu0 0.0
        %806 = vmatprep.subr.mxu0 0.0
        %807 = vmatpush1.msra.mxu0 0.0
        %808 = vmatprep.subr.mxu0 0.0
        %809 = vmatpush1.msra.mxu0 0.0
        %810 = vmatprep.subr.mxu0 0.0
        %811 = vmatpush1.msra.mxu0 0.0
        %812 = vmatprep.subr.mxu0 0.0
        %813 = vmatpush1.msra.mxu0 0.0
        %814 = vmatprep.subr.mxu0 0.0
        %815 = vmatpush1.msra.mxu0 0.0
        %816 = vmatprep.subr.mxu0 0.0
        %817 = vmatpush1.msra.mxu0 0.0
        %818 = vmatprep.subr.mxu0 0.0
        %819 = vmatpush1.msra.mxu0 0.0
        %820 = vmatprep.subr.mxu0 0.0
        %821 = vmatpush1.msra.mxu0 0.0
        %822 = vmatprep.subr.mxu0 0.0
        %823 = vmatpush1.msra.mxu0 0.0
        %824 = vmatprep.subr.mxu0 0.0
        %825 = vmatpush1.msra.mxu0 0.0
        %826 = vmatprep.subr.mxu0 0.0
        %827 = vmatpush1.msra.mxu0 0.0
        %828 = vmatprep.subr.mxu0 0.0
        %829 = vmatpush1.msra.mxu0 0.0
        %830 = vmatprep.subr.mxu0 0.0
        %831 = vmatpush1.msra.mxu0 0.0
        %832 = vmatprep.subr.mxu0 0.0
        %833 = vmatpush1.msra.mxu0 0.0
        %834 = vmatprep.subr.mxu0 0.0
        %835 = vmatpush1.msra.mxu0 0.0
        %836 = vmatprep.subr.mxu0 0.0
        %837 = vmatpush1.msra.mxu0 0.0
        %838 = vmatprep.subr.mxu0 0.0
        %839 = vmatpush1.msra.mxu0 0.0
        %840 = vmatprep.subr.mxu0 0.0
        %841 = vmatpush1.msra.mxu0 0.0
        %842 = vmatprep.subr.mxu0 0.0
        %843 = vmatpush1.msra.mxu0 0.0
        %844 = vmatprep.subr.mxu0 0.0
        %845 = vmatpush1.msra.mxu0 0.0
        %846 = vmatprep.subr.mxu0 0.0
        %847 = vmatpush1.msra.mxu0 0.0
        %848 = vmatprep.subr.mxu0 0.0
        %849 = vmatpush1.msra.mxu0 0.0
        %850 = vmatprep.subr.mxu0 0.0
        %851 = vmatpush1.msra.mxu0 0.0
        %852 = vmatprep.subr.mxu0 0.0
        %853 = vmatpush1.msra.mxu0 0.0
        %854 = vmatprep.subr.mxu0 0.0
        %855 = vmatpush1.msra.mxu0 0.0
        %856 = vmatprep.mubr.f32.mxu0 0.0
        %857 = vmatmul.mubr.f32.gmra.mrb[0].mxu0 %v787
        %v858 = vpop.f32.mrb[0].mxu0
        %v859 = vadd.f32 0.0, %v858
        %v860 = vpop.f32.mrb[0].mxu0
        %861 = vmatprep.mubr.f32.mxu0 0.0
        %862 = vmatmul.mubr.f32.gmra.mrb[0].mxu0 %v790
        %v863 = vpop.f32.mrb[0].mxu0
        %v864 = vadd.f32 0.0, %v863
        %v865 = vpop.f32.mrb[0].mxu0
        %866 = vdwg.mxu0
        %v868 = vsel %vm299, %v293, 0
        %v871 = vsel %vm299, %v294, 0
        %873 = vmatprep.subr.mxu0 0.0
        %874 = vmatpush1.msra.mxu0 %v295
        %875 = vmatprep.subr.mxu0 0.0
        %876 = vmatpush1.msra.mxu0 %v296
        %877 = vmatprep.subr.mxu0 0.0
        %878 = vmatpush1.msra.mxu0 0.0
        %879 = vmatprep.subr.mxu0 0.0
        %880 = vmatpush1.msra.mxu0 0.0
        %881 = vmatprep.subr.mxu0 0.0
        %882 = vmatpush1.msra.mxu0 0.0
        %883 = vmatprep.subr.mxu0 0.0
        %884 = vmatpush1.msra.mxu0 0.0
        %885 = vmatprep.subr.mxu0 0.0
        %886 = vmatpush1.msra.mxu0 0.0
        %887 = vmatprep.subr.mxu0 0.0
        %888 = vmatpush1.msra.mxu0 0.0
        %889 = vmatprep.subr.mxu0 0.0
        %890 = vmatpush1.msra.mxu0 0.0
        %891 = vmatprep.subr.mxu0 0.0
        %892 = vmatpush1.msra.mxu0 0.0
        %893 = vmatprep.subr.mxu0 0.0
        %894 = vmatpush1.msra.mxu0 0.0
        %895 = vmatprep.subr.mxu0 0.0
        %896 = vmatpush1.msra.mxu0 0.0
        %897 = vmatprep.subr.mxu0 0.0
        %898 = vmatpush1.msra.mxu0 0.0
        %899 = vmatprep.subr.mxu0 0.0
        %900 = vmatpush1.msra.mxu0 0.0
        %901 = vmatprep.subr.mxu0 0.0
        %902 = vmatpush1.msra.mxu0 0.0
        %903 = vmatprep.subr.mxu0 0.0
        %904 = vmatpush1.msra.mxu0 0.0
        %905 = vmatprep.subr.mxu0 0.0
        %906 = vmatpush1.msra.mxu0 0.0
        %907 = vmatprep.subr.mxu0 0.0
        %908 = vmatpush1.msra.mxu0 0.0
        %909 = vmatprep.subr.mxu0 0.0
        %910 = vmatpush1.msra.mxu0 0.0
        %911 = vmatprep.subr.mxu0 0.0
        %912 = vmatpush1.msra.mxu0 0.0
        %913 = vmatprep.subr.mxu0 0.0
        %914 = vmatpush1.msra.mxu0 0.0
        %915 = vmatprep.subr.mxu0 0.0
        %916 = vmatpush1.msra.mxu0 0.0
        %917 = vmatprep.subr.mxu0 0.0
        %918 = vmatpush1.msra.mxu0 0.0
        %919 = vmatprep.subr.mxu0 0.0
        %920 = vmatpush1.msra.mxu0 0.0
        %921 = vmatprep.subr.mxu0 0.0
        %922 = vmatpush1.msra.mxu0 0.0
        %923 = vmatprep.subr.mxu0 0.0
        %924 = vmatpush1.msra.mxu0 0.0
        %925 = vmatprep.subr.mxu0 0.0
        %926 = vmatpush1.msra.mxu0 0.0
        %927 = vmatprep.subr.mxu0 0.0
        %928 = vmatpush1.msra.mxu0 0.0
        %929 = vmatprep.subr.mxu0 0.0
        %930 = vmatpush1.msra.mxu0 0.0
        %931 = vmatprep.subr.mxu0 0.0
        %932 = vmatpush1.msra.mxu0 0.0
        %933 = vmatprep.subr.mxu0 0.0
        %934 = vmatpush1.msra.mxu0 0.0
        %935 = vmatprep.subr.mxu0 0.0
        %936 = vmatpush1.msra.mxu0 0.0
        %937 = vmatprep.mubr.f32.mxu0 0.0
        %938 = vmatmul.mubr.f32.gmra.mrb[0].mxu0 %v868
        %v939 = vpop.f32.mrb[0].mxu0
        %v940 = vadd.f32 0.0, %v939
        %v941 = vpop.f32.mrb[0].mxu0
        %942 = vmatprep.mubr.f32.mxu0 0.0
        %943 = vmatmul.mubr.f32.gmra.mrb[0].mxu0 %v871
        %v944 = vpop.f32.mrb[0].mxu0
        %v945 = vadd.f32 0.0, %v944
        %v946 = vpop.f32.mrb[0].mxu0
        %947 = vdwg.mxu0
        %v949 = vsel %vm299, %v297, 0
        %v952 = vsel %vm299, %v298, 0
        %954 = vmatprep.subr.mxu0 0.0
        %955 = vmatpush1.msra.mxu0 %v373
        %956 = vmatprep.subr.mxu0 0.0
        %957 = vmatpush1.msra.mxu0 %v378
        %958 = vmatprep.subr.mxu0 0.0
        %959 = vmatpush1.msra.mxu0 0.0
        %960 = vmatprep.subr.mxu0 0.0
        %961 = vmatpush1.msra.mxu0 0.0
        %962 = vmatprep.subr.mxu0 0.0
        %963 = vmatpush1.msra.mxu0 0.0
        %964 = vmatprep.subr.mxu0 0.0
        %965 = vmatpush1.msra.mxu0 0.0
        %966 = vmatprep.subr.mxu0 0.0
        %967 = vmatpush1.msra.mxu0 0.0
        %968 = vmatprep.subr.mxu0 0.0
        %969 = vmatpush1.msra.mxu0 0.0
        %970 = vmatprep.subr.mxu0 0.0
        %971 = vmatpush1.msra.mxu0 0.0
        %972 = vmatprep.subr.mxu0 0.0
        %973 = vmatpush1.msra.mxu0 0.0
        %974 = vmatprep.subr.mxu0 0.0
        %975 = vmatpush1.msra.mxu0 0.0
        %976 = vmatprep.subr.mxu0 0.0
        %977 = vmatpush1.msra.mxu0 0.0
        %978 = vmatprep.subr.mxu0 0.0
        %979 = vmatpush1.msra.mxu0 0.0
        %980 = vmatprep.subr.mxu0 0.0
        %981 = vmatpush1.msra.mxu0 0.0
        %982 = vmatprep.subr.mxu0 0.0
        %983 = vmatpush1.msra.mxu0 0.0
        %984 = vmatprep.subr.mxu0 0.0
        %985 = vmatpush1.msra.mxu0 0.0
        %986 = vmatprep.subr.mxu0 0.0
        %987 = vmatpush1.msra.mxu0 0.0
        %988 = vmatprep.subr.mxu0 0.0
        %989 = vmatpush1.msra.mxu0 0.0
        %990 = vmatprep.subr.mxu0 0.0
        %991 = vmatpush1.msra.mxu0 0.0
        %992 = vmatprep.subr.mxu0 0.0
        %993 = vmatpush1.msra.mxu0 0.0
        %994 = vmatprep.subr.mxu0 0.0
        %995 = vmatpush1.msra.mxu0 0.0
        %996 = vmatprep.subr.mxu0 0.0
        %997 = vmatpush1.msra.mxu0 0.0
        %998 = vmatprep.subr.mxu0 0.0
        %999 = vmatpush1.msra.mxu0 0.0
        %1000 = vmatprep.subr.mxu0 0.0
        %1001 = vmatpush1.msra.mxu0 0.0
        %1002 = vmatprep.subr.mxu0 0.0
        %1003 = vmatpush1.msra.mxu0 0.0
        %1004 = vmatprep.subr.mxu0 0.0
        %1005 = vmatpush1.msra.mxu0 0.0
        %1006 = vmatprep.subr.mxu0 0.0
        %1007 = vmatpush1.msra.mxu0 0.0
        %1008 = vmatprep.subr.mxu0 0.0
        %1009 = vmatpush1.msra.mxu0 0.0
        %1010 = vmatprep.subr.mxu0 0.0
        %1011 = vmatpush1.msra.mxu0 0.0
        %1012 = vmatprep.subr.mxu0 0.0
        %1013 = vmatpush1.msra.mxu0 0.0
        %1014 = vmatprep.subr.mxu0 0.0
        %1015 = vmatpush1.msra.mxu0 0.0
        %1016 = vmatprep.subr.mxu0 0.0
        %1017 = vmatpush1.msra.mxu0 0.0
        %1018 = vmatprep.mubr.f32.mxu0 0.0
        %1019 = vmatmul.mubr.f32.gmra.mrb[0].mxu0 %v949
        %v1020 = vpop.f32.mrb[0].mxu0
        %v1021 = vadd.f32 0.0, %v1020
        %v1022 = vpop.f32.mrb[0].mxu0
        %1023 = vmatprep.mubr.f32.mxu0 0.0
        %1024 = vmatmul.mubr.f32.gmra.mrb[0].mxu0 %v952
        %v1025 = vpop.f32.mrb[0].mxu0
        %v1026 = vadd.f32 0.0, %v1025
        %v1027 = vpop.f32.mrb[0].mxu0
        %1028 = vdwg.mxu0
        %1029 = vmatprep.subr.mxu0 0.0
        %1030 = vmatpush1.msra.mxu0 %v454
        %1031 = vmatprep.subr.mxu0 0.0
        %1032 = vmatpush1.msra.mxu0 %v459
        %1033 = vmatprep.subr.mxu0 0.0
        %1034 = vmatpush1.msra.mxu0 0.0
        %1035 = vmatprep.subr.mxu0 0.0
        %1036 = vmatpush1.msra.mxu0 0.0
        %1037 = vmatprep.subr.mxu0 0.0
        %1038 = vmatpush1.msra.mxu0 0.0
        %1039 = vmatprep.subr.mxu0 0.0
        %1040 = vmatpush1.msra.mxu0 0.0
        %1041 = vmatprep.subr.mxu0 0.0
        %1042 = vmatpush1.msra.mxu0 0.0
        %1043 = vmatprep.subr.mxu0 0.0
        %1044 = vmatpush1.msra.mxu0 0.0
        %1045 = vmatprep.subr.mxu0 0.0
        %1046 = vmatpush1.msra.mxu0 0.0
        %1047 = vmatprep.subr.mxu0 0.0
        %1048 = vmatpush1.msra.mxu0 0.0
        %1049 = vmatprep.subr.mxu0 0.0
        %1050 = vmatpush1.msra.mxu0 0.0
        %1051 = vmatprep.subr.mxu0 0.0
        %1052 = vmatpush1.msra.mxu0 0.0
        %1053 = vmatprep.subr.mxu0 0.0
        %1054 = vmatpush1.msra.mxu0 0.0
        %1055 = vmatprep.subr.mxu0 0.0
        %1056 = vmatpush1.msra.mxu0 0.0
        %1057 = vmatprep.subr.mxu0 0.0
        %1058 = vmatpush1.msra.mxu0 0.0
        %1059 = vmatprep.subr.mxu0 0.0
        %1060 = vmatpush1.msra.mxu0 0.0
        %1061 = vmatprep.subr.mxu0 0.0
        %1062 = vmatpush1.msra.mxu0 0.0
        %1063 = vmatprep.subr.mxu0 0.0
        %1064 = vmatpush1.msra.mxu0 0.0
        %1065 = vmatprep.subr.mxu0 0.0
        %1066 = vmatpush1.msra.mxu0 0.0
        %1067 = vmatprep.subr.mxu0 0.0
        %1068 = vmatpush1.msra.mxu0 0.0
        %1069 = vmatprep.subr.mxu0 0.0
        %1070 = vmatpush1.msra.mxu0 0.0
        %1071 = vmatprep.subr.mxu0 0.0
        %1072 = vmatpush1.msra.mxu0 0.0
        %1073 = vmatprep.subr.mxu0 0.0
        %1074 = vmatpush1.msra.mxu0 0.0
        %1075 = vmatprep.subr.mxu0 0.0
        %1076 = vmatpush1.msra.mxu0 0.0
        %1077 = vmatprep.subr.mxu0 0.0
        %1078 = vmatpush1.msra.mxu0 0.0
        %1079 = vmatprep.subr.mxu0 0.0
        %1080 = vmatpush1.msra.mxu0 0.0
        %1081 = vmatprep.subr.mxu0 0.0
        %1082 = vmatpush1.msra.mxu0 0.0
        %1083 = vmatprep.subr.mxu0 0.0
        %1084 = vmatpush1.msra.mxu0 0.0
        %1085 = vmatprep.subr.mxu0 0.0
        %1086 = vmatpush1.msra.mxu0 0.0
        %1087 = vmatprep.subr.mxu0 0.0
        %1088 = vmatpush1.msra.mxu0 0.0
        %1089 = vmatprep.subr.mxu0 0.0
        %1090 = vmatpush1.msra.mxu0 0.0
        %1091 = vmatprep.subr.mxu0 0.0
        %1092 = vmatpush1.msra.mxu0 0.0
        %1093 = vmatprep.mubr.f32.mxu0 0.0
        %1094 = vmatmul.mubr.f32.gmra.mrb[0].mxu0 %v949
        %v1095 = vpop.f32.mrb[0].mxu0
        %v1096 = vadd.f32 0.0, %v1095
        %v1097 = vpop.f32.mrb[0].mxu0
        %1098 = vmatprep.mubr.f32.mxu0 0.0
        %1099 = vmatmul.mubr.f32.gmra.mrb[0].mxu0 %v952
        %v1100 = vpop.f32.mrb[0].mxu0
        %v1101 = vadd.f32 0.0, %v1100
        %v1102 = vpop.f32.mrb[0].mxu0
        %1103 = vdwg.mxu0
        %1104 = vmatprep.subr.mxu0 0.0
        %1105 = vmatpush1.msra.mxu0 %v535
        %1106 = vmatprep.subr.mxu0 0.0
        %1107 = vmatpush1.msra.mxu0 %v540
        %1108 = vmatprep.subr.mxu0 0.0
        %1109 = vmatpush1.msra.mxu0 0.0
        %1110 = vmatprep.subr.mxu0 0.0
        %1111 = vmatpush1.msra.mxu0 0.0
        %1112 = vmatprep.subr.mxu0 0.0
        %1113 = vmatpush1.msra.mxu0 0.0
        %1114 = vmatprep.subr.mxu0 0.0
        %1115 = vmatpush1.msra.mxu0 0.0
        %1116 = vmatprep.subr.mxu0 0.0
        %1117 = vmatpush1.msra.mxu0 0.0
        %1118 = vmatprep.subr.mxu0 0.0
        %1119 = vmatpush1.msra.mxu0 0.0
        %1120 = vmatprep.subr.mxu0 0.0
        %1121 = vmatpush1.msra.mxu0 0.0
        %1122 = vmatprep.subr.mxu0 0.0
        %1123 = vmatpush1.msra.mxu0 0.0
        %1124 = vmatprep.subr.mxu0 0.0
        %1125 = vmatpush1.msra.mxu0 0.0
        %1126 = vmatprep.subr.mxu0 0.0
        %1127 = vmatpush1.msra.mxu0 0.0
        %1128 = vmatprep.subr.mxu0 0.0
        %1129 = vmatpush1.msra.mxu0 0.0
        %1130 = vmatprep.subr.mxu0 0.0
        %1131 = vmatpush1.msra.mxu0 0.0
        %1132 = vmatprep.subr.mxu0 0.0
        %1133 = vmatpush1.msra.mxu0 0.0
        %1134 = vmatprep.subr.mxu0 0.0
        %1135 = vmatpush1.msra.mxu0 0.0
        %1136 = vmatprep.subr.mxu0 0.0
        %1137 = vmatpush1.msra.mxu0 0.0
        %1138 = vmatprep.subr.mxu0 0.0
        %1139 = vmatpush1.msra.mxu0 0.0
        %1140 = vmatprep.subr.mxu0 0.0
        %1141 = vmatpush1.msra.mxu0 0.0
        %1142 = vmatprep.subr.mxu0 0.0
        %1143 = vmatpush1.msra.mxu0 0.0
        %1144 = vmatprep.subr.mxu0 0.0
        %1145 = vmatpush1.msra.mxu0 0.0
        %1146 = vmatprep.subr.mxu0 0.0
        %1147 = vmatpush1.msra.mxu0 0.0
        %1148 = vmatprep.subr.mxu0 0.0
        %1149 = vmatpush1.msra.mxu0 0.0
        %1150 = vmatprep.subr.mxu0 0.0
        %1151 = vmatpush1.msra.mxu0 0.0
        %1152 = vmatprep.subr.mxu0 0.0
        %1153 = vmatpush1.msra.mxu0 0.0
        %1154 = vmatprep.subr.mxu0 0.0
        %1155 = vmatpush1.msra.mxu0 0.0
        %1156 = vmatprep.subr.mxu0 0.0
        %1157 = vmatpush1.msra.mxu0 0.0
        %1158 = vmatprep.subr.mxu0 0.0
        %1159 = vmatpush1.msra.mxu0 0.0
        %1160 = vmatprep.subr.mxu0 0.0
        %1161 = vmatpush1.msra.mxu0 0.0
        %1162 = vmatprep.subr.mxu0 0.0
        %1163 = vmatpush1.msra.mxu0 0.0
        %1164 = vmatprep.subr.mxu0 0.0
        %1165 = vmatpush1.msra.mxu0 0.0
        %1166 = vmatprep.subr.mxu0 0.0
        %1167 = vmatpush1.msra.mxu0 0.0
        %1168 = vmatprep.mubr.f32.mxu0 0.0
        %1169 = vmatmul.mubr.f32.gmra.mrb[0].mxu0 %v949
        %v1170 = vpop.f32.mrb[0].mxu0
        %v1171 = vadd.f32 0.0, %v1170
        %v1172 = vpop.f32.mrb[0].mxu0
        %1173 = vmatprep.mubr.f32.mxu0 0.0
        %1174 = vmatmul.mubr.f32.gmra.mrb[0].mxu0 %v952
        %v1175 = vpop.f32.mrb[0].mxu0
        %v1176 = vadd.f32 0.0, %v1175
        %v1177 = vpop.f32.mrb[0].mxu0
        %1178 = vdwg.mxu0
        %1179 = vmatprep.subr.mxu0 0.0
        %1180 = vmatpush1.msra.mxu0 %v616
        %1181 = vmatprep.subr.mxu0 0.0
        %1182 = vmatpush1.msra.mxu0 %v621
        %1183 = vmatprep.subr.mxu0 0.0
        %1184 = vmatpush1.msra.mxu0 0.0
        %1185 = vmatprep.subr.mxu0 0.0
        %1186 = vmatpush1.msra.mxu0 0.0
        %1187 = vmatprep.subr.mxu0 0.0
        %1188 = vmatpush1.msra.mxu0 0.0
        %1189 = vmatprep.subr.mxu0 0.0
        %1190 = vmatpush1.msra.mxu0 0.0
        %1191 = vmatprep.subr.mxu0 0.0
        %1192 = vmatpush1.msra.mxu0 0.0
        %1193 = vmatprep.subr.mxu0 0.0
        %1194 = vmatpush1.msra.mxu0 0.0
        %1195 = vmatprep.subr.mxu0 0.0
        %1196 = vmatpush1.msra.mxu0 0.0
        %1197 = vmatprep.subr.mxu0 0.0
        %1198 = vmatpush1.msra.mxu0 0.0
        %1199 = vmatprep.subr.mxu0 0.0
        %1200 = vmatpush1.msra.mxu0 0.0
        %1201 = vmatprep.subr.mxu0 0.0
        %1202 = vmatpush1.msra.mxu0 0.0
        %1203 = vmatprep.subr.mxu0 0.0
        %1204 = vmatpush1.msra.mxu0 0.0
        %1205 = vmatprep.subr.mxu0 0.0
        %1206 = vmatpush1.msra.mxu0 0.0
        %1207 = vmatprep.subr.mxu0 0.0
        %1208 = vmatpush1.msra.mxu0 0.0
        %1209 = vmatprep.subr.mxu0 0.0
        %1210 = vmatpush1.msra.mxu0 0.0
        %1211 = vmatprep.subr.mxu0 0.0
        %1212 = vmatpush1.msra.mxu0 0.0
        %1213 = vmatprep.subr.mxu0 0.0
        %1214 = vmatpush1.msra.mxu0 0.0
        %1215 = vmatprep.subr.mxu0 0.0
        %1216 = vmatpush1.msra.mxu0 0.0
        %1217 = vmatprep.subr.mxu0 0.0
        %1218 = vmatpush1.msra.mxu0 0.0
        %1219 = vmatprep.subr.mxu0 0.0
        %1220 = vmatpush1.msra.mxu0 0.0
        %1221 = vmatprep.subr.mxu0 0.0
        %1222 = vmatpush1.msra.mxu0 0.0
        %1223 = vmatprep.subr.mxu0 0.0
        %1224 = vmatpush1.msra.mxu0 0.0
        %1225 = vmatprep.subr.mxu0 0.0
        %1226 = vmatpush1.msra.mxu0 0.0
        %1227 = vmatprep.subr.mxu0 0.0
        %1228 = vmatpush1.msra.mxu0 0.0
        %1229 = vmatprep.subr.mxu0 0.0
        %1230 = vmatpush1.msra.mxu0 0.0
        %1231 = vmatprep.subr.mxu0 0.0
        %1232 = vmatpush1.msra.mxu0 0.0
        %1233 = vmatprep.subr.mxu0 0.0
        %1234 = vmatpush1.msra.mxu0 0.0
        %1235 = vmatprep.subr.mxu0 0.0
        %1236 = vmatpush1.msra.mxu0 0.0
        %1237 = vmatprep.subr.mxu0 0.0
        %1238 = vmatpush1.msra.mxu0 0.0
        %1239 = vmatprep.subr.mxu0 0.0
        %1240 = vmatpush1.msra.mxu0 0.0
        %1241 = vmatprep.subr.mxu0 0.0
        %1242 = vmatpush1.msra.mxu0 0.0
        %1243 = vmatprep.mubr.f32.mxu0 0.0
        %1244 = vmatmul.mubr.f32.gmra.mrb[0].mxu0 %v949
        %v1245 = vpop.f32.mrb[0].mxu0
        %v1246 = vadd.f32 0.0, %v1245
        %v1247 = vpop.f32.mrb[0].mxu0
        %1248 = vmatprep.mubr.f32.mxu0 0.0
        %1249 = vmatmul.mubr.f32.gmra.mrb[0].mxu0 %v952
        %v1250 = vpop.f32.mrb[0].mxu0
        %v1251 = vadd.f32 0.0, %v1250
        %v1252 = vpop.f32.mrb[0].mxu0
        %1253 = vdwg.mxu0
        %1254 = vmatprep.subr.mxu0 0.0
        %1255 = vmatpush1.msra.mxu0 %v697
        %1256 = vmatprep.subr.mxu0 0.0
        %1257 = vmatpush1.msra.mxu0 %v702
        %1258 = vmatprep.subr.mxu0 0.0
        %1259 = vmatpush1.msra.mxu0 0.0
        %1260 = vmatprep.subr.mxu0 0.0
        %1261 = vmatpush1.msra.mxu0 0.0
        %1262 = vmatprep.subr.mxu0 0.0
        %1263 = vmatpush1.msra.mxu0 0.0
        %1264 = vmatprep.subr.mxu0 0.0
        %1265 = vmatpush1.msra.mxu0 0.0
        %1266 = vmatprep.subr.mxu0 0.0
        %1267 = vmatpush1.msra.mxu0 0.0
        %1268 = vmatprep.subr.mxu0 0.0
        %1269 = vmatpush1.msra.mxu0 0.0
        %1270 = vmatprep.subr.mxu0 0.0
        %1271 = vmatpush1.msra.mxu0 0.0
        %1272 = vmatprep.subr.mxu0 0.0
        %1273 = vmatpush1.msra.mxu0 0.0
        %1274 = vmatprep.subr.mxu0 0.0
        %1275 = vmatpush1.msra.mxu0 0.0
        %1276 = vmatprep.subr.mxu0 0.0
        %1277 = vmatpush1.msra.mxu0 0.0
        %1278 = vmatprep.subr.mxu0 0.0
        %1279 = vmatpush1.msra.mxu0 0.0
        %1280 = vmatprep.subr.mxu0 0.0
        %1281 = vmatpush1.msra.mxu0 0.0
        %1282 = vmatprep.subr.mxu0 0.0
        %1283 = vmatpush1.msra.mxu0 0.0
        %1284 = vmatprep.subr.mxu0 0.0
        %1285 = vmatpush1.msra.mxu0 0.0
        %1286 = vmatprep.subr.mxu0 0.0
        %1287 = vmatpush1.msra.mxu0 0.0
        %1288 = vmatprep.subr.mxu0 0.0
        %1289 = vmatpush1.msra.mxu0 0.0
        %1290 = vmatprep.subr.mxu0 0.0
        %1291 = vmatpush1.msra.mxu0 0.0
        %1292 = vmatprep.subr.mxu0 0.0
        %1293 = vmatpush1.msra.mxu0 0.0
        %1294 = vmatprep.subr.mxu0 0.0
        %1295 = vmatpush1.msra.mxu0 0.0
        %1296 = vmatprep.subr.mxu0 0.0
        %1297 = vmatpush1.msra.mxu0 0.0
        %1298 = vmatprep.subr.mxu0 0.0
        %1299 = vmatpush1.msra.mxu0 0.0
        %1300 = vmatprep.subr.mxu0 0.0
        %1301 = vmatpush1.msra.mxu0 0.0
        %1302 = vmatprep.subr.mxu0 0.0
        %1303 = vmatpush1.msra.mxu0 0.0
        %1304 = vmatprep.subr.mxu0 0.0
        %1305 = vmatpush1.msra.mxu0 0.0
        %1306 = vmatprep.subr.mxu0 0.0
        %1307 = vmatpush1.msra.mxu0 0.0
        %1308 = vmatprep.subr.mxu0 0.0
        %1309 = vmatpush1.msra.mxu0 0.0
        %1310 = vmatprep.subr.mxu0 0.0
        %1311 = vmatpush1.msra.mxu0 0.0
        %1312 = vmatprep.subr.mxu0 0.0
        %1313 = vmatpush1.msra.mxu0 0.0
        %1314 = vmatprep.subr.mxu0 0.0
        %1315 = vmatpush1.msra.mxu0 0.0
        %1316 = vmatprep.subr.mxu0 0.0
        %1317 = vmatpush1.msra.mxu0 0.0
        %1318 = vmatprep.mubr.f32.mxu0 0.0
        %1319 = vmatmul.mubr.f32.gmra.mrb[0].mxu0 %v949
        %v1320 = vpop.f32.mrb[0].mxu0
        %v1321 = vadd.f32 0.0, %v1320
        %v1322 = vpop.f32.mrb[0].mxu0
        %1323 = vmatprep.mubr.f32.mxu0 0.0
        %1324 = vmatmul.mubr.f32.gmra.mrb[0].mxu0 %v952
        %v1325 = vpop.f32.mrb[0].mxu0
        %v1326 = vadd.f32 0.0, %v1325
        %v1327 = vpop.f32.mrb[0].mxu0
        %1328 = vdwg.mxu0
        %1329 = vmatprep.subr.mxu0 0.0
        %1330 = vmatpush1.msra.mxu0 %v778
        %1331 = vmatprep.subr.mxu0 0.0
        %1332 = vmatpush1.msra.mxu0 %v783
        %1333 = vmatprep.subr.mxu0 0.0
        %1334 = vmatpush1.msra.mxu0 0.0
        %1335 = vmatprep.subr.mxu0 0.0
        %1336 = vmatpush1.msra.mxu0 0.0
        %1337 = vmatprep.subr.mxu0 0.0
        %1338 = vmatpush1.msra.mxu0 0.0
        %1339 = vmatprep.subr.mxu0 0.0
        %1340 = vmatpush1.msra.mxu0 0.0
        %1341 = vmatprep.subr.mxu0 0.0
        %1342 = vmatpush1.msra.mxu0 0.0
        %1343 = vmatprep.subr.mxu0 0.0
        %1344 = vmatpush1.msra.mxu0 0.0
        %1345 = vmatprep.subr.mxu0 0.0
        %1346 = vmatpush1.msra.mxu0 0.0
        %1347 = vmatprep.subr.mxu0 0.0
        %1348 = vmatpush1.msra.mxu0 0.0
        %1349 = vmatprep.subr.mxu0 0.0
        %1350 = vmatpush1.msra.mxu0 0.0
        %1351 = vmatprep.subr.mxu0 0.0
        %1352 = vmatpush1.msra.mxu0 0.0
        %1353 = vmatprep.subr.mxu0 0.0
        %1354 = vmatpush1.msra.mxu0 0.0
        %1355 = vmatprep.subr.mxu0 0.0
        %1356 = vmatpush1.msra.mxu0 0.0
        %1357 = vmatprep.subr.mxu0 0.0
        %1358 = vmatpush1.msra.mxu0 0.0
        %1359 = vmatprep.subr.mxu0 0.0
        %1360 = vmatpush1.msra.mxu0 0.0
        %1361 = vmatprep.subr.mxu0 0.0
        %1362 = vmatpush1.msra.mxu0 0.0
        %1363 = vmatprep.subr.mxu0 0.0
        %1364 = vmatpush1.msra.mxu0 0.0
        %1365 = vmatprep.subr.mxu0 0.0
        %1366 = vmatpush1.msra.mxu0 0.0
        %1367 = vmatprep.subr.mxu0 0.0
        %1368 = vmatpush1.msra.mxu0 0.0
        %1369 = vmatprep.subr.mxu0 0.0
        %1370 = vmatpush1.msra.mxu0 0.0
        %1371 = vmatprep.subr.mxu0 0.0
        %1372 = vmatpush1.msra.mxu0 0.0
        %1373 = vmatprep.subr.mxu0 0.0
        %1374 = vmatpush1.msra.mxu0 0.0
        %1375 = vmatprep.subr.mxu0 0.0
        %1376 = vmatpush1.msra.mxu0 0.0
        %1377 = vmatprep.subr.mxu0 0.0
        %1378 = vmatpush1.msra.mxu0 0.0
        %1379 = vmatprep.subr.mxu0 0.0
        %1380 = vmatpush1.msra.mxu0 0.0
        %1381 = vmatprep.subr.mxu0 0.0
        %1382 = vmatpush1.msra.mxu0 0.0
        %1383 = vmatprep.subr.mxu0 0.0
        %1384 = vmatpush1.msra.mxu0 0.0
        %1385 = vmatprep.subr.mxu0 0.0
        %1386 = vmatpush1.msra.mxu0 0.0
        %1387 = vmatprep.subr.mxu0 0.0
        %1388 = vmatpush1.msra.mxu0 0.0
        %1389 = vmatprep.subr.mxu0 0.0
        %1390 = vmatpush1.msra.mxu0 0.0
        %1391 = vmatprep.subr.mxu0 0.0
        %1392 = vmatpush1.msra.mxu0 0.0
        %1393 = vmatprep.mubr.f32.mxu0 0.0
        %1394 = vmatmul.mubr.f32.gmra.mrb[0].mxu0 %v949
        %v1395 = vpop.f32.mrb[0].mxu0
        %v1396 = vadd.f32 0.0, %v1395
        %v1397 = vpop.f32.mrb[0].mxu0
        %1398 = vmatprep.mubr.f32.mxu0 0.0
        %1399 = vmatmul.mubr.f32.gmra.mrb[0].mxu0 %v952
        %v1400 = vpop.f32.mrb[0].mxu0
        %v1401 = vadd.f32 0.0, %v1400
        %v1402 = vpop.f32.mrb[0].mxu0
        %1403 = vdwg.mxu0
        %1404 = vmatprep.subr.mxu0 0.0
        %1405 = vmatpush1.msra.mxu0 %v859
        %1406 = vmatprep.subr.mxu0 0.0
        %1407 = vmatpush1.msra.mxu0 %v864
        %1408 = vmatprep.subr.mxu0 0.0
        %1409 = vmatpush1.msra.mxu0 0.0
        %1410 = vmatprep.subr.mxu0 0.0
        %1411 = vmatpush1.msra.mxu0 0.0
        %1412 = vmatprep.subr.mxu0 0.0
        %1413 = vmatpush1.msra.mxu0 0.0
        %1414 = vmatprep.subr.mxu0 0.0
        %1415 = vmatpush1.msra.mxu0 0.0
        %1416 = vmatprep.subr.mxu0 0.0
        %1417 = vmatpush1.msra.mxu0 0.0
        %1418 = vmatprep.subr.mxu0 0.0
        %1419 = vmatpush1.msra.mxu0 0.0
        %1420 = vmatprep.subr.mxu0 0.0
        %1421 = vmatpush1.msra.mxu0 0.0
        %1422 = vmatprep.subr.mxu0 0.0
        %1423 = vmatpush1.msra.mxu0 0.0
        %1424 = vmatprep.subr.mxu0 0.0
        %1425 = vmatpush1.msra.mxu0 0.0
        %1426 = vmatprep.subr.mxu0 0.0
        %1427 = vmatpush1.msra.mxu0 0.0
        %1428 = vmatprep.subr.mxu0 0.0
        %1429 = vmatpush1.msra.mxu0 0.0
        %1430 = vmatprep.subr.mxu0 0.0
        %1431 = vmatpush1.msra.mxu0 0.0
        %1432 = vmatprep.subr.mxu0 0.0
        %1433 = vmatpush1.msra.mxu0 0.0
        %1434 = vmatprep.subr.mxu0 0.0
        %1435 = vmatpush1.msra.mxu0 0.0
        %1436 = vmatprep.subr.mxu0 0.0
        %1437 = vmatpush1.msra.mxu0 0.0
        %1438 = vmatprep.subr.mxu0 0.0
        %1439 = vmatpush1.msra.mxu0 0.0
        %1440 = vmatprep.subr.mxu0 0.0
        %1441 = vmatpush1.msra.mxu0 0.0
        %1442 = vmatprep.subr.mxu0 0.0
        %1443 = vmatpush1.msra.mxu0 0.0
        %1444 = vmatprep.subr.mxu0 0.0
        %1445 = vmatpush1.msra.mxu0 0.0
        %1446 = vmatprep.subr.mxu0 0.0
        %1447 = vmatpush1.msra.mxu0 0.0
        %1448 = vmatprep.subr.mxu0 0.0
        %1449 = vmatpush1.msra.mxu0 0.0
        %1450 = vmatprep.subr.mxu0 0.0
        %1451 = vmatpush1.msra.mxu0 0.0
        %1452 = vmatprep.subr.mxu0 0.0
        %1453 = vmatpush1.msra.mxu0 0.0
        %1454 = vmatprep.subr.mxu0 0.0
        %1455 = vmatpush1.msra.mxu0 0.0
        %1456 = vmatprep.subr.mxu0 0.0
        %1457 = vmatpush1.msra.mxu0 0.0
        %1458 = vmatprep.subr.mxu0 0.0
        %1459 = vmatpush1.msra.mxu0 0.0
        %1460 = vmatprep.subr.mxu0 0.0
        %1461 = vmatpush1.msra.mxu0 0.0
        %1462 = vmatprep.subr.mxu0 0.0
        %1463 = vmatpush1.msra.mxu0 0.0
        %1464 = vmatprep.subr.mxu0 0.0
        %1465 = vmatpush1.msra.mxu0 0.0
        %1466 = vmatprep.subr.mxu0 0.0
        %1467 = vmatpush1.msra.mxu0 0.0
        %1468 = vmatprep.mubr.f32.mxu0 0.0
        %1469 = vmatmul.mubr.f32.gmra.mrb[0].mxu0 %v949
        %v1470 = vpop.f32.mrb[0].mxu0
        %v1471 = vadd.f32 0.0, %v1470
        %v1472 = vpop.f32.mrb[0].mxu0
        %1473 = vmatprep.mubr.f32.mxu0 0.0
        %1474 = vmatmul.mubr.f32.gmra.mrb[0].mxu0 %v952
        %v1475 = vpop.f32.mrb[0].mxu0
        %v1476 = vadd.f32 0.0, %v1475
        %v1477 = vpop.f32.mrb[0].mxu0
        %1478 = vdwg.mxu0
        %1479 = vmatprep.subr.mxu0 0.0
        %1480 = vmatpush1.msra.mxu0 %v940
        %1481 = vmatprep.subr.mxu0 0.0
        %1482 = vmatpush1.msra.mxu0 %v945
        %1483 = vmatprep.subr.mxu0 0.0
        %1484 = vmatpush1.msra.mxu0 0.0
        %1485 = vmatprep.subr.mxu0 0.0
        %1486 = vmatpush1.msra.mxu0 0.0
        %1487 = vmatprep.subr.mxu0 0.0
        %1488 = vmatpush1.msra.mxu0 0.0
        %1489 = vmatprep.subr.mxu0 0.0
        %1490 = vmatpush1.msra.mxu0 0.0
        %1491 = vmatprep.subr.mxu0 0.0
        %1492 = vmatpush1.msra.mxu0 0.0
        %1493 = vmatprep.subr.mxu0 0.0
        %1494 = vmatpush1.msra.mxu0 0.0
        %1495 = vmatprep.subr.mxu0 0.0
        %1496 = vmatpush1.msra.mxu0 0.0
        %1497 = vmatprep.subr.mxu0 0.0
        %1498 = vmatpush1.msra.mxu0 0.0
        %1499 = vmatprep.subr.mxu0 0.0
        %1500 = vmatpush1.msra.mxu0 0.0
        %1501 = vmatprep.subr.mxu0 0.0
        %1502 = vmatpush1.msra.mxu0 0.0
        %1503 = vmatprep.subr.mxu0 0.0
        %1504 = vmatpush1.msra.mxu0 0.0
        %1505 = vmatprep.subr.mxu0 0.0
        %1506 = vmatpush1.msra.mxu0 0.0
        %1507 = vmatprep.subr.mxu0 0.0
        %1508 = vmatpush1.msra.mxu0 0.0
        %1509 = vmatprep.subr.mxu0 0.0
        %1510 = vmatpush1.msra.mxu0 0.0
        %1511 = vmatprep.subr.mxu0 0.0
        %1512 = vmatpush1.msra.mxu0 0.0
        %1513 = vmatprep.subr.mxu0 0.0
        %1514 = vmatpush1.msra.mxu0 0.0
        %1515 = vmatprep.subr.mxu0 0.0
        %1516 = vmatpush1.msra.mxu0 0.0
        %1517 = vmatprep.subr.mxu0 0.0
        %1518 = vmatpush1.msra.mxu0 0.0
        %1519 = vmatprep.subr.mxu0 0.0
        %1520 = vmatpush1.msra.mxu0 0.0
        %1521 = vmatprep.subr.mxu0 0.0
        %1522 = vmatpush1.msra.mxu0 0.0
        %1523 = vmatprep.subr.mxu0 0.0
        %1524 = vmatpush1.msra.mxu0 0.0
        %1525 = vmatprep.subr.mxu0 0.0
        %1526 = vmatpush1.msra.mxu0 0.0
        %1527 = vmatprep.subr.mxu0 0.0
        %1528 = vmatpush1.msra.mxu0 0.0
        %1529 = vmatprep.subr.mxu0 0.0
        %1530 = vmatpush1.msra.mxu0 0.0
        %1531 = vmatprep.subr.mxu0 0.0
        %1532 = vmatpush1.msra.mxu0 0.0
        %1533 = vmatprep.subr.mxu0 0.0
        %1534 = vmatpush1.msra.mxu0 0.0
        %1535 = vmatprep.subr.mxu0 0.0
        %1536 = vmatpush1.msra.mxu0 0.0
        %1537 = vmatprep.subr.mxu0 0.0
        %1538 = vmatpush1.msra.mxu0 0.0
        %1539 = vmatprep.subr.mxu0 0.0
        %1540 = vmatpush1.msra.mxu0 0.0
        %1541 = vmatprep.subr.mxu0 0.0
        %1542 = vmatpush1.msra.mxu0 0.0
        %1543 = vmatprep.mubr.f32.mxu0 0.0
        %1544 = vmatmul.mubr.f32.gmra.mrb[0].mxu0 %v949
        %v1545 = vpop.f32.mrb[0].mxu0
        %v1546 = vadd.f32 0.0, %v1545
        %v1547 = vpop.f32.mrb[0].mxu0
        %1548 = vmatprep.mubr.f32.mxu0 0.0
        %1549 = vmatmul.mubr.f32.gmra.mrb[0].mxu0 %v952
        %v1550 = vpop.f32.mrb[0].mxu0
        %v1551 = vadd.f32 0.0, %v1550
        %v1552 = vpop.f32.mrb[0].mxu0
        %1553 = vdwg.mxu0
        %1554 = vst.msk [vmem:[%s277] sm:$0xff] %vm299, %v1021
        %1555 = vst.msk [vmem:[%s277 + $0x8] sm:$0xff] %vm299, %v1026
        %1556 = vst.msk [vmem:[%s277 + $0x10] sm:$0xff] %vm299, %v1096
        %1557 = vst.msk [vmem:[%s277 + $0x18] sm:$0xff] %vm299, %v1101
        %1558 = vst.msk [vmem:[%s277 + $0x20] sm:$0xff] %vm299, %v1171
        %1559 = vst.msk [vmem:[%s277 + $0x28] sm:$0xff] %vm299, %v1176
        %1560 = vst.msk [vmem:[%s277 + $0x30] sm:$0xff] %vm299, %v1246
        %1561 = vst.msk [vmem:[%s277 + $0x38] sm:$0xff] %vm299, %v1251
        %1562 = vst.msk [vmem:[%s277 + $0x40] sm:$0xff] %vm299, %v1321
        %1563 = vst.msk [vmem:[%s277 + $0x48] sm:$0xff] %vm299, %v1326
        %1564 = vst.msk [vmem:[%s277 + $0x50] sm:$0xff] %vm299, %v1396
        %1565 = vst.msk [vmem:[%s277 + $0x58] sm:$0xff] %vm299, %v1401
        %1566 = vst.msk [vmem:[%s277 + $0x60] sm:$0xff] %vm299, %v1471
        %1567 = vst.msk [vmem:[%s277 + $0x68] sm:$0xff] %vm299, %v1476
        %1568 = vst.msk [vmem:[%s277 + $0x70] sm:$0xff] %vm299, %v1546
        %1569 = vst.msk [vmem:[%s277 + $0x78] sm:$0xff] %vm299, %v1551
        %s1570 = sand.u32 %s118, 1
        %s1571 = scalar_lea.sflag [#allocation6], %s1570
        %s1572 = sand.u32 %s118, 1
        %s1573 = smul.addr %s1572, 128
        %s1574 = scalar_lea.vmem [#allocation10], %s1573
        // Predicated region
        $region45: #{tpu_custom_call.1} parent=31 // pred_check
          %p1575 = pneg %p128
        $region46: #{tpu_custom_call.1} parent=31 // pred_check_branch
          %1577 = sbr.rel (%p1575) target = $region48
        $region47: #{tpu_custom_call.1} parent=31 // pred_region
          %s1579 = ssub.s32 2048, 2048
          %1580 = vsyncadd %s1571, %s1579
          %s1581 = smul.addr %s28, 16
          %s1582 = smul.addr %s1581, 128
          %s1583 = scalar_lea.hbm %s4, %s1582
          %s1584 = sshll.u32 %s1574, 4
          %s1585 = int_to_ptr.vmem [resolvable:$true] %s1584
          %1590 = dma.vmem_to_hbm [thread:$0]  %s1585, 2048, %s1583, %s1571, 128, 128, 8
        $region48: #{tpu_custom_call.1} parent=31 // pred_fallthru
          _
      $region32: #{tpu_custom_call.1} parent=5 // pred_fallthru
        _
      %p1591 = scmp.le.s32.totalorder 2, %s23
      // Predicated region
      $region49: #{tpu_custom_call.1} parent=5 // pred_check
        %p1592 = pneg %p1591
      $region50: #{tpu_custom_call.1} parent=5 // pred_check_branch
        %1594 = sbr.rel (%p1592) target = $region52
      $region51: #{tpu_custom_call.1} parent=5 // pred_region
        %s1595 = ssub.s32 %s23, 2
        // Predicated region
        $region53: #{tpu_custom_call.1} parent=51 // pred_check
          %p1596 = pneg %p134
        $region54: #{tpu_custom_call.1} parent=51 // pred_check_branch
          %1598 = sbr.rel (%p1596) target = $region56
        $region55: #{tpu_custom_call.1} parent=51 // pred_region
          %s1599 = sand.u32 %s119, 1
          %s1600 = scalar_lea.sflag [#allocation6], %s1599
          %s1601 = sand.u32 %s119, 1
          %s1602 = smul.addr %s1601, 128
          %s1603 = scalar_lea.vmem [#allocation10], %s1602
          %1604 = dma.done %s1600, 2048
        $region56: #{tpu_custom_call.1} parent=51 // pred_fallthru
          _
      $region52: #{tpu_custom_call.1} parent=5 // pred_fallthru
        _
    $region6: #{tpu_custom_call.1} parent=1 // loop_footer
      %s27 = sadd.s32 1, %s23
    $region7: #{tpu_custom_call.1} parent=1 // loop_footer_branch
      %22 = sbr.rel target = $region3
    $region8: #{tpu_custom_call.1} parent=1 // loop_exit
      _
    %1605 = vsyncpa [#allocation5], 1
    %s1606 = scalar_lea.sflag [#allocation5], 1
    %1607 = vsyncpa %s1606, 1
    %1608 = vsyncpa [#allocation8], 1
    %s1609 = scalar_lea.sflag [#allocation8], 1
    %1610 = vsyncpa %s1609, 1
    %1611 = vsyncpa [#allocation6], 1
    %s1612 = scalar_lea.sflag [#allocation6], 1
    %1613 = vsyncpa %s1612, 1

</llo_original>
